<compile_context>
chip_gen: v6e
topology: v6e:2x2x1
jax: 0.10.0
libtpu: 0.0.40
codegen_flags: <defaults>
</compile_context>

<pallas_src>
import math

import jax
import jax.numpy as jnp
import numpy as np
from jax import lax
from jax.experimental import pallas as pl
from jax.experimental.pallas import tpu as pltpu


def _vff_kernel(x_ref, rep_ref, scale_ref, phase_ref, o_ref):
    """One row tile: x (rows, d) -> interleaved fourier features (rows, d*n_feat)."""
    x = x_ref[...].astype(jnp.float32)

    # Lane-repeat each x element n_feat times, already in the interleaved
    # (d, n_feat) column order, via a one-hot matmul on the otherwise-idle MXU
    # (exact reconstruction of x under HIGHEST precision, no cross-lane
    # shuffles on the VPU/XLU).  This is the only MXU work in the kernel.
    x_rep = jnp.dot(x, rep_ref[...],
                    precision=lax.Precision.HIGHEST,
                    preferred_element_type=jnp.float32)

    # theta[:, dd*n_feat + k] = x[:, dd] * 2**(n_min + k//2) * pi  (+ pi/2 if k odd)
    # Even columns: single f32 multiply -> bit-identical argument to the
    # reference's x * 2**n * pi.  Odd columns: cos(theta) = sin(theta + pi/2);
    # the add after the large multiply costs <= ~1 ulp(theta) of argument error.
    theta = x_rep * scale_ref[...] + phase_ref[...]

    # Exactly one transcendental per output element, lane-dense store.
    o_ref[...] = jnp.sin(theta).astype(o_ref.dtype)


def variational_fourier_features(x, n_min: int = 0, n_max: int = 8, *,
                                 tile_rows=None):
    """x: (b, l, d) float array. Returns (b, l, d, 2*(n_max-n_min+1))."""
    assert n_min <= n_max
    b, l, d = x.shape
    n_oct = n_max - n_min + 1
    n_feat = 2 * n_oct
    dn_feat = d * n_feat
    bl = b * l

    x2 = x.reshape(bl, d)

    # ---- trace-time constants ---------------------------------------------
    # Per-output-column octave / parity (interleaved order: [sin_n0, cos_n0, ...]).
    k = np.arange(n_feat)
    scale_feat = (np.exp2(n_min + (k // 2)).astype(np.float64) * np.pi
                  ).astype(np.float32)                                # (n_feat,)
    phase_feat = np.where(k % 2 == 1, np.pi / 2.0, 0.0
                          ).astype(np.float32)                        # (n_feat,)
    scale = np.tile(scale_feat, d).reshape(1, dn_feat)                # (1, d*n_feat)
    phase = np.tile(phase_feat, d).reshape(1, dn_feat)                # (1, d*n_feat)

    # One-hot "repeat along lanes, interleaved": rep[dd, dd*n_feat + k] = 1.
    # O(d^2 * n_feat) f32 ~ 18 KiB at d=16 (the O(d^2*n_oct*n_feat) scatter
    # matrices of the previous version are gone).
    rep = np.kron(np.eye(d, dtype=np.float32),
                  np.ones((1, n_feat), dtype=np.float32))             # (d, d*n_feat)

    # ---- row tiling ---------------------------------------------------------
    out_itemsize = 4  # budget assuming f32 output; bf16 only shrinks the block
    if tile_rows is None:
        # ~8 MiB lane-dense output blocks: keeps the ~0.35 us per-step overhead
        # negligible and the output DMA ~90%+ efficient on v5e/v6e/v7x.
        # Multiple of 256 keeps the repeat-matmul M granules full.
        target_block_bytes = 8 * 1024 * 1024
        tile_rows = max(256,
                        (target_block_bytes // (dn_feat * out_itemsize))
                        // 256 * 256)
    if tile_rows >= bl:
        tile_rows = bl                               # single full-dim block
    else:
        # Sublane-aligned tile.  NOTE: if x is bfloat16, pass a multiple of 16
        # explicitly to keep the input DMA sublane-packed.
        tile_rows = max(8, (tile_rows // 8) * 8)

    grid = (pl.cdiv(bl, tile_rows),)

    out2 = pl.pallas_call(
        _vff_kernel,
        out_shape=jax.ShapeDtypeStruct((bl, dn_feat), x.dtype),
        grid=grid,
        in_specs=[
            pl.BlockSpec((tile_rows, d), lambda i: (i, 0)),        # x rows
            pl.BlockSpec((d, dn_feat), lambda i: (0, 0)),          # repeat one-hot
            pl.BlockSpec((1, dn_feat), lambda i: (0, 0)),          # scales
            pl.BlockSpec((1, dn_feat), lambda i: (0, 0)),          # phases
        ],
        out_specs=pl.BlockSpec((tile_rows, dn_feat), lambda i: (i, 0)),
        compiler_params=pltpu.CompilerParams(
            dimension_semantics=("parallel",),    # megacore: split rows on v7x
            # Double-buffered 8 MiB output + input blocks ~ 18 MiB: raise the
            # scoped-VMEM limit above v5e's 16 MiB default (no-op on v6e/v7x,
            # comfortably under v7x's 64 MiB physical per-TC VMEM).
            vmem_limit_bytes=32 * 1024 * 1024,
        ),
        cost_estimate=pl.CostEstimate(
            flops=(2 * bl * d * dn_feat        # one-hot repeat matmul
                   + 2 * bl * dn_feat),        # scale mul + phase add
            transcendentals=bl * dn_feat,
            bytes_accessed=(bl * d * x.dtype.itemsize
                            + bl * dn_feat * x.dtype.itemsize
                            + 4 * (rep.size + scale.size + phase.size)),
        ),
    )(x2, jnp.asarray(rep), jnp.asarray(scale), jnp.asarray(phase))

    # Row-major (bl, d*n_feat) is already the (b, l, d, n_feat) memory order:
    # this reshape is free (no HBM transpose).
    return out2.reshape(b, l, d, n_feat)


def _reference(x, n_min: int = 0, n_max: int = 8):
    feats = []
    for n in range(n_min, n_max + 1):
        freqs = x * (2.0 ** n) * math.pi
        feats.append(jnp.sin(freqs))
        feats.append(jnp.cos(freqs))
    return jnp.stack(feats, axis=-1)  # (b, l, d, n_feat)


if __name__ == "__main__":
    key = jax.random.PRNGKey(0)
    k1, k2 = jax.random.split(key)

    # Tolerance note: even (sin) columns are built from bit-identical f32
    # arguments.  Odd (cos) columns use sin(theta + pi/2); the post-multiply
    # add contributes up to ~1 ulp(theta) of argument error (~2.5e-4 at the
    # top octave for |x|~3.5), plus any divergence between the two libraries'
    # large-argument reductions, so 1e-3 leaves safe headroom while still
    # catching any interleave/scale/layout bug (which would be O(1)).
    ATOL = 1e-3

    # Case 1: default tiling (single block at this small size).
    b, l, d = 2, 8, 16
    x = jax.random.normal(k1, (b, l, d), dtype=jnp.float32)
    out = jax.block_until_ready(variational_fourier_features(x, 0, 8))
    ref = _reference(x, 0, 8)
    assert out.shape == (b, l, d, 18), out.shape
    assert jnp.allclose(out, ref, atol=ATOL, rtol=0.0), (
        "max err", float(jnp.max(jnp.abs(out - ref))))

    # Case 2: multi-tile grid with a ragged (masked) last row block.
    b2, l2, d2 = 3, 5, 16
    xr = jax.random.normal(k2, (b2, l2, d2), dtype=jnp.float32)
    out_r = jax.block_until_ready(
        variational_fourier_features(xr, 0, 8, tile_rows=8))
    ref_r = _reference(xr, 0, 8)
    assert out_r.shape == (b2, l2, d2, 18), out_r.shape
    assert jnp.allclose(out_r, ref_r, atol=ATOL, rtol=0.0), (
        "max err", float(jnp.max(jnp.abs(out_r - ref_r))))

    print("KERNEL_OK")
</pallas_src>

<mosaic_0001>
module attributes {stable_mosaic.version = 11 : i64} {
  func.func @_vff_kernel(%arg0: i32, %arg1: memref<16x16xf32, #tpu.memory_space<vmem>>, %arg2: memref<16x288xf32, #tpu.memory_space<vmem>>, %arg3: memref<1x288xf32, #tpu.memory_space<vmem>>, %arg4: memref<1x288xf32, #tpu.memory_space<vmem>>, %arg5: memref<16x288xf32, #tpu.memory_space<vmem>>) attributes {dimension_semantics = [#tpu.dimension_semantics<parallel>], iteration_bounds = array<i64: 1>, scalar_prefetch = 0 : i64, scratch_operands = 0 : i64, tpu.core_type = #tpu.core_type<tc>, window_params = [{transform_indices = @transform_0, window_bounds = array<i64: 16, 16>}, {pipeline_mode = #tpu.pipeline_mode<synchronous>, transform_indices = @transform_1, window_bounds = array<i64: 16, 288>}, {pipeline_mode = #tpu.pipeline_mode<synchronous>, transform_indices = @transform_2, window_bounds = array<i64: 1, 288>}, {pipeline_mode = #tpu.pipeline_mode<synchronous>, transform_indices = @transform_3, window_bounds = array<i64: 1, 288>}, {transform_indices = @transform_4, window_bounds = array<i64: 16, 288>}]} {
    %c0 = arith.constant 0 : index
    %c0_0 = arith.constant 0 : index
    %0 = vector.load %arg1[%c0, %c0_0] : memref<16x16xf32, #tpu.memory_space<vmem>>, vector<16x16xf32>
    %c0_1 = arith.constant 0 : index
    %c0_2 = arith.constant 0 : index
    %1 = vector.load %arg2[%c0_1, %c0_2] : memref<16x288xf32, #tpu.memory_space<vmem>>, vector<16x288xf32>
    %cst = arith.constant dense<0.000000e+00> : vector<16x288xf32>
    %2 = tpu.matmul %0, %1, %cst {dimension_numbers = #tpu.dot_dimension_numbers<[1], [0], [0], [1], [0, 0, 1, 1], [], []>, precision = #tpu.contract_precision<fp32>} : vector<16x16xf32>, vector<16x288xf32>, vector<16x288xf32> -> vector<16x288xf32>
    %c0_3 = arith.constant 0 : index
    %c0_4 = arith.constant 0 : index
    %3 = vector.load %arg3[%c0_3, %c0_4] : memref<1x288xf32, #tpu.memory_space<vmem>>, vector<1x288xf32>
    %4 = vector.broadcast %3 : vector<1x288xf32> to vector<16x288xf32>
    %5 = arith.mulf %2, %4 : vector<16x288xf32>
    %c0_5 = arith.constant 0 : index
    %c0_6 = arith.constant 0 : index
    %6 = vector.load %arg4[%c0_5, %c0_6] : memref<1x288xf32, #tpu.memory_space<vmem>>, vector<1x288xf32>
    %7 = vector.broadcast %6 : vector<1x288xf32> to vector<16x288xf32>
    %8 = arith.addf %5, %7 : vector<16x288xf32>
    %9 = math.sin %8 : vector<16x288xf32>
    %c0_7 = arith.constant 0 : index
    %c0_8 = arith.constant 0 : index
    %10 = vector.load %arg5[%c0_7, %c0_8] : memref<16x288xf32, #tpu.memory_space<vmem>>, vector<16x288xf32>
    tpu.vector_store %arg5[%c0_7, %c0_8], %9 {strides = array<i32>} : memref<16x288xf32, #tpu.memory_space<vmem>>, vector<16x288xf32>,
    return
  }
  func.func @transform_0(%arg0: i32) -> (i32, i32) {
    %c0_i32 = arith.constant 0 : i32
    %c0_i32_0 = arith.constant 0 : i32
    return %arg0, %c0_i32 : i32, i32
  }
  func.func @transform_1(%arg0: i32) -> (i32, i32) {
    %c0_i32 = arith.constant 0 : i32
    %c0_i32_0 = arith.constant 0 : i32
    %c0_i32_1 = arith.constant 0 : i32
    return %c0_i32, %c0_i32_0 : i32, i32
  }
  func.func @transform_2(%arg0: i32) -> (i32, i32) {
    %c0_i32 = arith.constant 0 : i32
    %c0_i32_0 = arith.constant 0 : i32
    %c0_i32_1 = arith.constant 0 : i32
    return %c0_i32, %c0_i32_0 : i32, i32
  }
  func.func @transform_3(%arg0: i32) -> (i32, i32) {
    %c0_i32 = arith.constant 0 : i32
    %c0_i32_0 = arith.constant 0 : i32
    %c0_i32_1 = arith.constant 0 : i32
    return %c0_i32, %c0_i32_0 : i32, i32
  }
  func.func @transform_4(%arg0: i32) -> (i32, i32) {
    %c0_i32 = arith.constant 0 : i32
    %c0_i32_0 = arith.constant 0 : i32
    return %arg0, %c0_i32 : i32, i32
  }
}

</mosaic_0001>

<llo_original>
// kernel: tpu_custom_call.1
$region0: #{tpu_custom_call.1}
  #allocation0 [shape = 'u32[]', space=smem, size = 0x4, offset = 0x4, fixed_abs, tag = 'smem constant byte address 0x4 - core index']
  #allocation1 [shape = 'u32[144,128]{1,0:T(1,128)}', space=vmem, size = 0x12000, scoped, tag = 'internal scratch']
  %s0 = inlined_call_operand.hbm [shape: f32[16,16], index: 0, kind: input, shape index: {}]
  %s1 = inlined_call_operand.hbm [shape: f32[16,288], index: 1, kind: input, shape index: {}]
  %s2 = inlined_call_operand.vmem [shape: f32[1,288], index: 2, kind: input, shape index: {}]
  %s3 = inlined_call_operand.hbm [shape: f32[1,288], index: 3, kind: input, shape index: {}]
  %s4 = inlined_call_operand.hbm [shape: f32[16,288], index: 4, kind: output, shape index: {}]
  %s5 = sld [smem:[#allocation0]]
  $region38: #{tpu_custom_call.1} parent=0
    _
  %s7 = ssub.s32 1, %s5
  %s8 = scalar_select 0, %s7, %s5
  $region1: #{tpu_custom_call.1} parent=0
    #allocation2 [shape = 'u8[8192]{0}', space=vmem, size = 0x2000, scoped, tag = 'input window, operand 0, single buffered']
    #allocation3 [shape = 's32[1]{0}', space=sflag, size = 0x4, scoped, tag = 'scoped memory for tpu_custom_call.1']
    #allocation4 [shape = 's32[1]{0}', space=sflag, size = 0x4, scoped, tag = 'scoped memory for tpu_custom_call.1']
    #allocation5 [shape = 'u8[24576]{0}', space=vmem, size = 0x6000, scoped, tag = 'input window, operand 1, single buffered']
    #allocation6 [shape = 's32[1]{0}', space=sflag, size = 0x4, scoped, tag = 'scoped memory for tpu_custom_call.1']
    #allocation7 [shape = 'u8[1536]{0}', space=vmem, size = 0x800, scoped, tag = 'input window, operand 3, single buffered']
    #allocation8 [shape = 'u8[24576]{0}', space=vmem, size = 0x6000, scoped, tag = 'output window, operand 0, single buffered']
    %9 = vsyncpa [#allocation3], 0
    %10 = vsyncpa [#allocation6], 0
    %11 = vsyncpa [#allocation4], 0
    // Predicated region
    $region2: #{tpu_custom_call.1} parent=1 // pred_check
      _
    $region3: #{tpu_custom_call.1} parent=1 // pred_check_branch
      %13 = sbr.rel (0) target = $region5
    $region4: #{tpu_custom_call.1} parent=1 // pred_region
      %s15 = ssub.s32 256, 256
      %16 = vsyncadd [#allocation3], %s15
      %s17 = sshll.u32 [#allocation2], 4
      %s18 = int_to_ptr.vmem [resolvable:$true] %s17
      %23 = dma.hbm_to_vmem [thread:$0]  %s0, 256, %s18, [#allocation3], 128, 128, 8
    $region5: #{tpu_custom_call.1} parent=1 // pred_fallthru
      _
    // Predicated region
    $region6: #{tpu_custom_call.1} parent=1 // pred_check
      _
    $region7: #{tpu_custom_call.1} parent=1 // pred_check_branch
      %25 = sbr.rel (0) target = $region9
    $region8: #{tpu_custom_call.1} parent=1 // pred_region
      %s27 = ssub.s32 768, 768
      %28 = vsyncadd [#allocation6], %s27
      %s29 = sshll.u32 [#allocation5], 4
      %s30 = int_to_ptr.vmem [resolvable:$true] %s29
      %35 = dma.hbm_to_vmem [thread:$0]  %s1, 768, %s30, [#allocation6], 384, 384, 24
    $region9: #{tpu_custom_call.1} parent=1 // pred_fallthru
      _
    // Predicated region
    $region10: #{tpu_custom_call.1} parent=1 // pred_check
      _
    $region11: #{tpu_custom_call.1} parent=1 // pred_check_branch
      %37 = sbr.rel (0) target = $region13
    $region12: #{tpu_custom_call.1} parent=1 // pred_region
      _
    $region13: #{tpu_custom_call.1} parent=1 // pred_fallthru
      _
    // Predicated region
    $region14: #{tpu_custom_call.1} parent=1 // pred_check
      _
    $region15: #{tpu_custom_call.1} parent=1 // pred_check_branch
      %39 = sbr.rel (0) target = $region17
    $region16: #{tpu_custom_call.1} parent=1 // pred_region
      %s41 = ssub.s32 48, 48
      %42 = vsyncadd [#allocation6], %s41
      %s44 = sshll.u32 [#allocation7], 4
      %s45 = int_to_ptr.vmem [resolvable:$true] %s44
      %47 = dma.hbm_to_vmem [thread:$0]  %s3, 48, %s45, [#allocation6]
    $region17: #{tpu_custom_call.1} parent=1 // pred_fallthru
      _
    // Predicated region
    $region18: #{tpu_custom_call.1} parent=1 // pred_check
      _
    $region19: #{tpu_custom_call.1} parent=1 // pred_check_branch
      %49 = sbr.rel (0) target = $region21
    $region20: #{tpu_custom_call.1} parent=1 // pred_region
      %50 = dma.done [#allocation3], 256
    $region21: #{tpu_custom_call.1} parent=1 // pred_fallthru
      _
    // Predicated region
    $region22: #{tpu_custom_call.1} parent=1 // pred_check
      _
    $region23: #{tpu_custom_call.1} parent=1 // pred_check_branch
      %52 = sbr.rel (0) target = $region25
    $region24: #{tpu_custom_call.1} parent=1 // pred_region
      %53 = dma.done [#allocation6], 768
    $region25: #{tpu_custom_call.1} parent=1 // pred_fallthru
      _
    // Predicated region
    $region26: #{tpu_custom_call.1} parent=1 // pred_check
      _
    $region27: #{tpu_custom_call.1} parent=1 // pred_check_branch
      %55 = sbr.rel (0) target = $region29
    $region28: #{tpu_custom_call.1} parent=1 // pred_region
      %56 = dma.done [#allocation6], 48
    $region29: #{tpu_custom_call.1} parent=1 // pred_fallthru
      _
    %v57 = vld [vmem:[#allocation2] sm:$0xff]
    %v58 = vld [vmem:[#allocation2 + $0x8] sm:$0xff]
    %v59 = vld [vmem:[#allocation5] sm:$0xff]
    %v60 = vld [vmem:[#allocation5 + $0x8] sm:$0xff]
    %v61 = vld [vmem:[#allocation5 + $0x10] sm:$0xff]
    %v62 = vld [vmem:[#allocation5 + $0x18] sm:$0xff]
    %v63 = vld [vmem:[#allocation5 + $0x20] sm:$0xff]
    %v64 = vld [vmem:[#allocation5 + $0x28] sm:$0xff]
    %vm65 = vcmask 130048
    %v67 = vsel %vm65, %v57, 0
    %v70 = vsel %vm65, %v58, 0
    %72 = vmatprep.subr.mxu0 0.0
    %73 = vmatpush1.msra.mxu0 0.0
    %74 = vmatprep.subr.mxu0 0.0
    %75 = vmatpush1.msra.mxu0 0.0
    %76 = vmatprep.subr.mxu0 0.0
    %77 = vmatpush1.msra.mxu0 0.0
    %78 = vmatprep.subr.mxu0 0.0
    %79 = vmatpush1.msra.mxu0 0.0
    %80 = vmatprep.subr.mxu0 0.0
    %81 = vmatpush1.msra.mxu0 0.0
    %82 = vmatprep.subr.mxu0 0.0
    %83 = vmatpush1.msra.mxu0 0.0
    %84 = vmatprep.subr.mxu0 0.0
    %85 = vmatpush1.msra.mxu0 0.0
    %86 = vmatprep.subr.mxu0 0.0
    %87 = vmatpush1.msra.mxu0 0.0
    %88 = vmatprep.subr.mxu0 0.0
    %89 = vmatpush1.msra.mxu0 0.0
    %90 = vmatprep.subr.mxu0 0.0
    %91 = vmatpush1.msra.mxu0 0.0
    %92 = vmatprep.subr.mxu0 0.0
    %93 = vmatpush1.msra.mxu0 0.0
    %94 = vmatprep.subr.mxu0 0.0
    %95 = vmatpush1.msra.mxu0 0.0
    %96 = vmatprep.subr.mxu0 0.0
    %97 = vmatpush1.msra.mxu0 0.0
    %98 = vmatprep.subr.mxu0 0.0
    %99 = vmatpush1.msra.mxu0 0.0
    %v100 = vand.u32 %v63, 4294901760
    %101 = vmatprep.subr.mxu0 %v100
    %v102 = vand.u32 %v62, 4294901760
    %103 = vmatpush1.msra.mxu0 %v102
    %v104 = vand.u32 %v60, 4294901760
    %105 = vmatprep.subr.mxu0 %v104
    %v106 = vand.u32 %v59, 4294901760
    %107 = vmatpush1.msra.mxu0 %v106
    %108 = vmatprep.subr.mxu0 0.0
    %109 = vmatpush2.msra.mxu0 0.0
    %110 = vmatprep.subr.mxu0 0.0
    %111 = vmatpush2.msra.mxu0 0.0
    %112 = vmatprep.subr.mxu0 0.0
    %113 = vmatpush2.msra.mxu0 0.0
    %114 = vmatprep.subr.mxu0 0.0
    %115 = vmatpush2.msra.mxu0 0.0
    %116 = vmatprep.subr.mxu0 0.0
    %117 = vmatpush2.msra.mxu0 0.0
    %118 = vmatprep.subr.mxu0 0.0
    %119 = vmatpush2.msra.mxu0 0.0
    %120 = vmatprep.subr.mxu0 0.0
    %121 = vmatpush2.msra.mxu0 0.0
    %122 = vmatprep.subr.mxu0 0.0
    %123 = vmatpush2.msra.mxu0 0.0
    %124 = vmatprep.subr.mxu0 0.0
    %125 = vmatpush2.msra.mxu0 0.0
    %126 = vmatprep.subr.mxu0 0.0
    %127 = vmatpush2.msra.mxu0 0.0
    %128 = vmatprep.subr.mxu0 0.0
    %129 = vmatpush2.msra.mxu0 0.0
    %130 = vmatprep.subr.mxu0 0.0
    %131 = vmatpush2.msra.mxu0 0.0
    %132 = vmatprep.subr.mxu0 0.0
    %133 = vmatpush2.msra.mxu0 0.0
    %134 = vmatprep.subr.mxu0 0.0
    %135 = vmatpush2.msra.mxu0 0.0
    %136 = vmatprep.subr.mxu0 0.0
    %137 = vmatpush2.msra.mxu0 0.0
    %138 = vmatprep.subr.mxu0 0.0
    %139 = vmatpush2.msra.mxu0 0.0
    %140 = vmatprep.mubr.f32.mxu0 0.0
    %v141 = vand.u32 %v67, 4294901760
    %v142 = vsub.f32 %v67, %v141
    %v143 = vand.u32 %v142, 4294901760
    %v144 = vsub.f32 %v142, %v143
    %v145 = vand.u32 %v144, 4294901760
    %146 = vmatmul.mubr.f32.gmra.mxu0 %v145
    %v147 = vpop.f32.mrf.mxu0
    %v148 = vadd.f32 0.0, %v147
    %v149 = vpop.f32.mrf.mxu0
    %v150 = vadd.f32 0.0, %v149
    %151 = vmatprep.mubr.f32.mxu0 0.0
    %v152 = vand.u32 %v70, 4294901760
    %v153 = vsub.f32 %v70, %v152
    %v154 = vand.u32 %v153, 4294901760
    %v155 = vsub.f32 %v153, %v154
    %v156 = vand.u32 %v155, 4294901760
    %157 = vmatmul.mubr.f32.gmra.mxu0 %v156
    %v158 = vpop.f32.mrf.mxu0
    %v159 = vadd.f32 0.0, %v158
    %v160 = vpop.f32.mrf.mxu0
    %v161 = vadd.f32 0.0, %v160
    %162 = vdwg.mxu0
    %163 = vmatprep.subr.mxu0 0.0
    %164 = vmatpush1.msra.mxu0 0.0
    %165 = vmatprep.subr.mxu0 0.0
    %166 = vmatpush1.msra.mxu0 0.0
    %167 = vmatprep.subr.mxu0 0.0
    %168 = vmatpush1.msra.mxu0 0.0
    %169 = vmatprep.subr.mxu0 0.0
    %170 = vmatpush1.msra.mxu0 0.0
    %171 = vmatprep.subr.mxu0 0.0
    %172 = vmatpush1.msra.mxu0 0.0
    %173 = vmatprep.subr.mxu0 0.0
    %174 = vmatpush1.msra.mxu0 0.0
    %175 = vmatprep.subr.mxu0 0.0
    %176 = vmatpush1.msra.mxu0 0.0
    %177 = vmatprep.subr.mxu0 0.0
    %178 = vmatpush1.msra.mxu0 0.0
    %179 = vmatprep.subr.mxu0 0.0
    %180 = vmatpush1.msra.mxu0 0.0
    %181 = vmatprep.subr.mxu0 0.0
    %182 = vmatpush1.msra.mxu0 0.0
    %183 = vmatprep.subr.mxu0 0.0
    %184 = vmatpush1.msra.mxu0 0.0
    %185 = vmatprep.subr.mxu0 0.0
    %186 = vmatpush1.msra.mxu0 0.0
    %187 = vmatprep.subr.mxu0 0.0
    %188 = vmatpush1.msra.mxu0 0.0
    %189 = vmatprep.subr.mxu0 0.0
    %190 = vmatpush1.msra.mxu0 0.0
    %v191 = vand.u32 %v63, 4294901760
    %v192 = vsub.f32 %v63, %v191
    %v193 = vand.u32 %v192, 4294901760
    %v194 = vsub.f32 %v192, %v193
    %v195 = vand.u32 %v194, 4294901760
    %196 = vmatprep.subr.mxu0 %v195
    %v197 = vand.u32 %v62, 4294901760
    %v198 = vsub.f32 %v62, %v197
    %v199 = vand.u32 %v198, 4294901760
    %v200 = vsub.f32 %v198, %v199
    %v201 = vand.u32 %v200, 4294901760
    %202 = vmatpush1.msra.mxu0 %v201
    %v203 = vand.u32 %v60, 4294901760
    %v204 = vsub.f32 %v60, %v203
    %v205 = vand.u32 %v204, 4294901760
    %v206 = vsub.f32 %v204, %v205
    %v207 = vand.u32 %v206, 4294901760
    %208 = vmatprep.subr.mxu0 %v207
    %v209 = vand.u32 %v59, 4294901760
    %v210 = vsub.f32 %v59, %v209
    %v211 = vand.u32 %v210, 4294901760
    %v212 = vsub.f32 %v210, %v211
    %v213 = vand.u32 %v212, 4294901760
    %214 = vmatpush1.msra.mxu0 %v213
    %215 = vmatprep.subr.mxu0 0.0
    %216 = vmatpush2.msra.mxu0 0.0
    %217 = vmatprep.subr.mxu0 0.0
    %218 = vmatpush2.msra.mxu0 0.0
    %219 = vmatprep.subr.mxu0 0.0
    %220 = vmatpush2.msra.mxu0 0.0
    %221 = vmatprep.subr.mxu0 0.0
    %222 = vmatpush2.msra.mxu0 0.0
    %223 = vmatprep.subr.mxu0 0.0
    %224 = vmatpush2.msra.mxu0 0.0
    %225 = vmatprep.subr.mxu0 0.0
    %226 = vmatpush2.msra.mxu0 0.0
    %227 = vmatprep.subr.mxu0 0.0
    %228 = vmatpush2.msra.mxu0 0.0
    %229 = vmatprep.subr.mxu0 0.0
    %230 = vmatpush2.msra.mxu0 0.0
    %231 = vmatprep.subr.mxu0 0.0
    %232 = vmatpush2.msra.mxu0 0.0
    %233 = vmatprep.subr.mxu0 0.0
    %234 = vmatpush2.msra.mxu0 0.0
    %235 = vmatprep.subr.mxu0 0.0
    %236 = vmatpush2.msra.mxu0 0.0
    %237 = vmatprep.subr.mxu0 0.0
    %238 = vmatpush2.msra.mxu0 0.0
    %239 = vmatprep.subr.mxu0 0.0
    %240 = vmatpush2.msra.mxu0 0.0
    %241 = vmatprep.subr.mxu0 0.0
    %242 = vmatpush2.msra.mxu0 0.0
    %243 = vmatprep.subr.mxu0 0.0
    %244 = vmatpush2.msra.mxu0 0.0
    %245 = vmatprep.subr.mxu0 0.0
    %246 = vmatpush2.msra.mxu0 0.0
    %247 = vmatprep.mubr.f32.mxu0 0.0
    %v248 = vand.u32 %v67, 4294901760
    %249 = vmatmul.mubr.f32.gmra.mxu0 %v248
    %v250 = vpop.f32.mrf.mxu0
    %v251 = vadd.f32 %v148, %v250
    %v252 = vpop.f32.mrf.mxu0
    %v253 = vadd.f32 %v150, %v252
    %254 = vmatprep.mubr.f32.mxu0 0.0
    %v255 = vand.u32 %v70, 4294901760
    %256 = vmatmul.mubr.f32.gmra.mxu0 %v255
    %v257 = vpop.f32.mrf.mxu0
    %v258 = vadd.f32 %v159, %v257
    %v259 = vpop.f32.mrf.mxu0
    %v260 = vadd.f32 %v161, %v259
    %261 = vdwg.mxu0
    %262 = vmatprep.subr.mxu0 0.0
    %263 = vmatpush1.msra.mxu0 0.0
    %264 = vmatprep.subr.mxu0 0.0
    %265 = vmatpush1.msra.mxu0 0.0
    %266 = vmatprep.subr.mxu0 0.0
    %267 = vmatpush1.msra.mxu0 0.0
    %268 = vmatprep.subr.mxu0 0.0
    %269 = vmatpush1.msra.mxu0 0.0
    %270 = vmatprep.subr.mxu0 0.0
    %271 = vmatpush1.msra.mxu0 0.0
    %272 = vmatprep.subr.mxu0 0.0
    %273 = vmatpush1.msra.mxu0 0.0
    %274 = vmatprep.subr.mxu0 0.0
    %275 = vmatpush1.msra.mxu0 0.0
    %276 = vmatprep.subr.mxu0 0.0
    %277 = vmatpush1.msra.mxu0 0.0
    %278 = vmatprep.subr.mxu0 0.0
    %279 = vmatpush1.msra.mxu0 0.0
    %280 = vmatprep.subr.mxu0 0.0
    %281 = vmatpush1.msra.mxu0 0.0
    %282 = vmatprep.subr.mxu0 0.0
    %283 = vmatpush1.msra.mxu0 0.0
    %284 = vmatprep.subr.mxu0 0.0
    %285 = vmatpush1.msra.mxu0 0.0
    %286 = vmatprep.subr.mxu0 0.0
    %287 = vmatpush1.msra.mxu0 0.0
    %288 = vmatprep.subr.mxu0 0.0
    %289 = vmatpush1.msra.mxu0 0.0
    %v290 = vand.u32 %v63, 4294901760
    %v291 = vsub.f32 %v63, %v290
    %292 = vmatprep.subr.mxu0 %v291
    %v293 = vand.u32 %v62, 4294901760
    %v294 = vsub.f32 %v62, %v293
    %295 = vmatpush1.msra.mxu0 %v294
    %v296 = vand.u32 %v60, 4294901760
    %v297 = vsub.f32 %v60, %v296
    %298 = vmatprep.subr.mxu0 %v297
    %v299 = vand.u32 %v59, 4294901760
    %v300 = vsub.f32 %v59, %v299
    %301 = vmatpush1.msra.mxu0 %v300
    %302 = vmatprep.subr.mxu0 0.0
    %303 = vmatpush2.msra.mxu0 0.0
    %304 = vmatprep.subr.mxu0 0.0
    %305 = vmatpush2.msra.mxu0 0.0
    %306 = vmatprep.subr.mxu0 0.0
    %307 = vmatpush2.msra.mxu0 0.0
    %308 = vmatprep.subr.mxu0 0.0
    %309 = vmatpush2.msra.mxu0 0.0
    %310 = vmatprep.subr.mxu0 0.0
    %311 = vmatpush2.msra.mxu0 0.0
    %312 = vmatprep.subr.mxu0 0.0
    %313 = vmatpush2.msra.mxu0 0.0
    %314 = vmatprep.subr.mxu0 0.0
    %315 = vmatpush2.msra.mxu0 0.0
    %316 = vmatprep.subr.mxu0 0.0
    %317 = vmatpush2.msra.mxu0 0.0
    %318 = vmatprep.subr.mxu0 0.0
    %319 = vmatpush2.msra.mxu0 0.0
    %320 = vmatprep.subr.mxu0 0.0
    %321 = vmatpush2.msra.mxu0 0.0
    %322 = vmatprep.subr.mxu0 0.0
    %323 = vmatpush2.msra.mxu0 0.0
    %324 = vmatprep.subr.mxu0 0.0
    %325 = vmatpush2.msra.mxu0 0.0
    %326 = vmatprep.subr.mxu0 0.0
    %327 = vmatpush2.msra.mxu0 0.0
    %328 = vmatprep.subr.mxu0 0.0
    %329 = vmatpush2.msra.mxu0 0.0
    %330 = vmatprep.subr.mxu0 0.0
    %331 = vmatpush2.msra.mxu0 0.0
    %332 = vmatprep.subr.mxu0 0.0
    %333 = vmatpush2.msra.mxu0 0.0
    %334 = vmatprep.mubr.f32.mxu0 0.0
    %v335 = vand.u32 %v67, 4294901760
    %v336 = vsub.f32 %v67, %v335
    %337 = vmatmul.mubr.f32.gmra.mxu0 %v336
    %v338 = vpop.f32.mrf.mxu0
    %v339 = vadd.f32 %v251, %v338
    %v340 = vpop.f32.mrf.mxu0
    %v341 = vadd.f32 %v253, %v340
    %342 = vmatprep.mubr.f32.mxu0 0.0
    %v343 = vand.u32 %v70, 4294901760
    %v344 = vsub.f32 %v70, %v343
    %345 = vmatmul.mubr.f32.gmra.mxu0 %v344
    %v346 = vpop.f32.mrf.mxu0
    %v347 = vadd.f32 %v258, %v346
    %v348 = vpop.f32.mrf.mxu0
    %v349 = vadd.f32 %v260, %v348
    %350 = vdwg.mxu0
    %351 = vmatprep.subr.mxu0 0.0
    %352 = vmatpush1.msra.mxu0 0.0
    %353 = vmatprep.subr.mxu0 0.0
    %354 = vmatpush1.msra.mxu0 0.0
    %355 = vmatprep.subr.mxu0 0.0
    %356 = vmatpush1.msra.mxu0 0.0
    %357 = vmatprep.subr.mxu0 0.0
    %358 = vmatpush1.msra.mxu0 0.0
    %359 = vmatprep.subr.mxu0 0.0
    %360 = vmatpush1.msra.mxu0 0.0
    %361 = vmatprep.subr.mxu0 0.0
    %362 = vmatpush1.msra.mxu0 0.0
    %363 = vmatprep.subr.mxu0 0.0
    %364 = vmatpush1.msra.mxu0 0.0
    %365 = vmatprep.subr.mxu0 0.0
    %366 = vmatpush1.msra.mxu0 0.0
    %367 = vmatprep.subr.mxu0 0.0
    %368 = vmatpush1.msra.mxu0 0.0
    %369 = vmatprep.subr.mxu0 0.0
    %370 = vmatpush1.msra.mxu0 0.0
    %371 = vmatprep.subr.mxu0 0.0
    %372 = vmatpush1.msra.mxu0 0.0
    %373 = vmatprep.subr.mxu0 0.0
    %374 = vmatpush1.msra.mxu0 0.0
    %375 = vmatprep.subr.mxu0 0.0
    %376 = vmatpush1.msra.mxu0 0.0
    %377 = vmatprep.subr.mxu0 0.0
    %378 = vmatpush1.msra.mxu0 0.0
    %v379 = vand.u32 %v63, 4294901760
    %380 = vmatprep.subr.mxu0 %v379
    %v381 = vand.u32 %v62, 4294901760
    %382 = vmatpush1.msra.mxu0 %v381
    %v383 = vand.u32 %v60, 4294901760
    %384 = vmatprep.subr.mxu0 %v383
    %v385 = vand.u32 %v59, 4294901760
    %386 = vmatpush1.msra.mxu0 %v385
    %387 = vmatprep.subr.mxu0 0.0
    %388 = vmatpush2.msra.mxu0 0.0
    %389 = vmatprep.subr.mxu0 0.0
    %390 = vmatpush2.msra.mxu0 0.0
    %391 = vmatprep.subr.mxu0 0.0
    %392 = vmatpush2.msra.mxu0 0.0
    %393 = vmatprep.subr.mxu0 0.0
    %394 = vmatpush2.msra.mxu0 0.0
    %395 = vmatprep.subr.mxu0 0.0
    %396 = vmatpush2.msra.mxu0 0.0
    %397 = vmatprep.subr.mxu0 0.0
    %398 = vmatpush2.msra.mxu0 0.0
    %399 = vmatprep.subr.mxu0 0.0
    %400 = vmatpush2.msra.mxu0 0.0
    %401 = vmatprep.subr.mxu0 0.0
    %402 = vmatpush2.msra.mxu0 0.0
    %403 = vmatprep.subr.mxu0 0.0
    %404 = vmatpush2.msra.mxu0 0.0
    %405 = vmatprep.subr.mxu0 0.0
    %406 = vmatpush2.msra.mxu0 0.0
    %407 = vmatprep.subr.mxu0 0.0
    %408 = vmatpush2.msra.mxu0 0.0
    %409 = vmatprep.subr.mxu0 0.0
    %410 = vmatpush2.msra.mxu0 0.0
    %411 = vmatprep.subr.mxu0 0.0
    %412 = vmatpush2.msra.mxu0 0.0
    %413 = vmatprep.subr.mxu0 0.0
    %414 = vmatpush2.msra.mxu0 0.0
    %415 = vmatprep.subr.mxu0 0.0
    %416 = vmatpush2.msra.mxu0 0.0
    %417 = vmatprep.subr.mxu0 0.0
    %418 = vmatpush2.msra.mxu0 0.0
    %419 = vmatprep.mubr.f32.mxu0 0.0
    %v420 = vand.u32 %v67, 4294901760
    %v421 = vsub.f32 %v67, %v420
    %v422 = vand.u32 %v421, 4294901760
    %423 = vmatmul.mubr.f32.gmra.mxu0 %v422
    %v424 = vpop.f32.mrf.mxu0
    %v425 = vadd.f32 %v339, %v424
    %v426 = vpop.f32.mrf.mxu0
    %v427 = vadd.f32 %v341, %v426
    %428 = vmatprep.mubr.f32.mxu0 0.0
    %v429 = vand.u32 %v70, 4294901760
    %v430 = vsub.f32 %v70, %v429
    %v431 = vand.u32 %v430, 4294901760
    %432 = vmatmul.mubr.f32.gmra.mxu0 %v431
    %v433 = vpop.f32.mrf.mxu0
    %v434 = vadd.f32 %v347, %v433
    %v435 = vpop.f32.mrf.mxu0
    %v436 = vadd.f32 %v349, %v435
    %437 = vdwg.mxu0
    %438 = vmatprep.subr.mxu0 0.0
    %439 = vmatpush1.msra.mxu0 0.0
    %440 = vmatprep.subr.mxu0 0.0
    %441 = vmatpush1.msra.mxu0 0.0
    %442 = vmatprep.subr.mxu0 0.0
    %443 = vmatpush1.msra.mxu0 0.0
    %444 = vmatprep.subr.mxu0 0.0
    %445 = vmatpush1.msra.mxu0 0.0
    %446 = vmatprep.subr.mxu0 0.0
    %447 = vmatpush1.msra.mxu0 0.0
    %448 = vmatprep.subr.mxu0 0.0
    %449 = vmatpush1.msra.mxu0 0.0
    %450 = vmatprep.subr.mxu0 0.0
    %451 = vmatpush1.msra.mxu0 0.0
    %452 = vmatprep.subr.mxu0 0.0
    %453 = vmatpush1.msra.mxu0 0.0
    %454 = vmatprep.subr.mxu0 0.0
    %455 = vmatpush1.msra.mxu0 0.0
    %456 = vmatprep.subr.mxu0 0.0
    %457 = vmatpush1.msra.mxu0 0.0
    %458 = vmatprep.subr.mxu0 0.0
    %459 = vmatpush1.msra.mxu0 0.0
    %460 = vmatprep.subr.mxu0 0.0
    %461 = vmatpush1.msra.mxu0 0.0
    %462 = vmatprep.subr.mxu0 0.0
    %463 = vmatpush1.msra.mxu0 0.0
    %464 = vmatprep.subr.mxu0 0.0
    %465 = vmatpush1.msra.mxu0 0.0
    %v466 = vand.u32 %v63, 4294901760
    %v467 = vsub.f32 %v63, %v466
    %v468 = vand.u32 %v467, 4294901760
    %469 = vmatprep.subr.mxu0 %v468
    %v470 = vand.u32 %v62, 4294901760
    %v471 = vsub.f32 %v62, %v470
    %v472 = vand.u32 %v471, 4294901760
    %473 = vmatpush1.msra.mxu0 %v472
    %v474 = vand.u32 %v60, 4294901760
    %v475 = vsub.f32 %v60, %v474
    %v476 = vand.u32 %v475, 4294901760
    %477 = vmatprep.subr.mxu0 %v476
    %v478 = vand.u32 %v59, 4294901760
    %v479 = vsub.f32 %v59, %v478
    %v480 = vand.u32 %v479, 4294901760
    %481 = vmatpush1.msra.mxu0 %v480
    %482 = vmatprep.subr.mxu0 0.0
    %483 = vmatpush2.msra.mxu0 0.0
    %484 = vmatprep.subr.mxu0 0.0
    %485 = vmatpush2.msra.mxu0 0.0
    %486 = vmatprep.subr.mxu0 0.0
    %487 = vmatpush2.msra.mxu0 0.0
    %488 = vmatprep.subr.mxu0 0.0
    %489 = vmatpush2.msra.mxu0 0.0
    %490 = vmatprep.subr.mxu0 0.0
    %491 = vmatpush2.msra.mxu0 0.0
    %492 = vmatprep.subr.mxu0 0.0
    %493 = vmatpush2.msra.mxu0 0.0
    %494 = vmatprep.subr.mxu0 0.0
    %495 = vmatpush2.msra.mxu0 0.0
    %496 = vmatprep.subr.mxu0 0.0
    %497 = vmatpush2.msra.mxu0 0.0
    %498 = vmatprep.subr.mxu0 0.0
    %499 = vmatpush2.msra.mxu0 0.0
    %500 = vmatprep.subr.mxu0 0.0
    %501 = vmatpush2.msra.mxu0 0.0
    %502 = vmatprep.subr.mxu0 0.0
    %503 = vmatpush2.msra.mxu0 0.0
    %504 = vmatprep.subr.mxu0 0.0
    %505 = vmatpush2.msra.mxu0 0.0
    %506 = vmatprep.subr.mxu0 0.0
    %507 = vmatpush2.msra.mxu0 0.0
    %508 = vmatprep.subr.mxu0 0.0
    %509 = vmatpush2.msra.mxu0 0.0
    %510 = vmatprep.subr.mxu0 0.0
    %511 = vmatpush2.msra.mxu0 0.0
    %512 = vmatprep.subr.mxu0 0.0
    %513 = vmatpush2.msra.mxu0 0.0
    %514 = vmatprep.mubr.f32.mxu0 0.0
    %v515 = vand.u32 %v67, 4294901760
    %516 = vmatmul.mubr.f32.gmra.mxu0 %v515
    %v517 = vpop.f32.mrf.mxu0
    %v518 = vadd.f32 %v425, %v517
    %v519 = vpop.f32.mrf.mxu0
    %v520 = vadd.f32 %v427, %v519
    %521 = vmatprep.mubr.f32.mxu0 0.0
    %v522 = vand.u32 %v70, 4294901760
    %523 = vmatmul.mubr.f32.gmra.mxu0 %v522
    %v524 = vpop.f32.mrf.mxu0
    %v525 = vadd.f32 %v434, %v524
    %v526 = vpop.f32.mrf.mxu0
    %v527 = vadd.f32 %v436, %v526
    %528 = vdwg.mxu0
    %529 = vmatprep.subr.mxu0 0.0
    %530 = vmatpush1.msra.mxu0 0.0
    %531 = vmatprep.subr.mxu0 0.0
    %532 = vmatpush1.msra.mxu0 0.0
    %533 = vmatprep.subr.mxu0 0.0
    %534 = vmatpush1.msra.mxu0 0.0
    %535 = vmatprep.subr.mxu0 0.0
    %536 = vmatpush1.msra.mxu0 0.0
    %537 = vmatprep.subr.mxu0 0.0
    %538 = vmatpush1.msra.mxu0 0.0
    %539 = vmatprep.subr.mxu0 0.0
    %540 = vmatpush1.msra.mxu0 0.0
    %541 = vmatprep.subr.mxu0 0.0
    %542 = vmatpush1.msra.mxu0 0.0
    %543 = vmatprep.subr.mxu0 0.0
    %544 = vmatpush1.msra.mxu0 0.0
    %545 = vmatprep.subr.mxu0 0.0
    %546 = vmatpush1.msra.mxu0 0.0
    %547 = vmatprep.subr.mxu0 0.0
    %548 = vmatpush1.msra.mxu0 0.0
    %549 = vmatprep.subr.mxu0 0.0
    %550 = vmatpush1.msra.mxu0 0.0
    %551 = vmatprep.subr.mxu0 0.0
    %552 = vmatpush1.msra.mxu0 0.0
    %553 = vmatprep.subr.mxu0 0.0
    %554 = vmatpush1.msra.mxu0 0.0
    %555 = vmatprep.subr.mxu0 0.0
    %556 = vmatpush1.msra.mxu0 0.0
    %v557 = vand.u32 %v63, 4294901760
    %558 = vmatprep.subr.mxu0 %v557
    %v559 = vand.u32 %v62, 4294901760
    %560 = vmatpush1.msra.mxu0 %v559
    %v561 = vand.u32 %v60, 4294901760
    %562 = vmatprep.subr.mxu0 %v561
    %v563 = vand.u32 %v59, 4294901760
    %564 = vmatpush1.msra.mxu0 %v563
    %565 = vmatprep.subr.mxu0 0.0
    %566 = vmatpush2.msra.mxu0 0.0
    %567 = vmatprep.subr.mxu0 0.0
    %568 = vmatpush2.msra.mxu0 0.0
    %569 = vmatprep.subr.mxu0 0.0
    %570 = vmatpush2.msra.mxu0 0.0
    %571 = vmatprep.subr.mxu0 0.0
    %572 = vmatpush2.msra.mxu0 0.0
    %573 = vmatprep.subr.mxu0 0.0
    %574 = vmatpush2.msra.mxu0 0.0
    %575 = vmatprep.subr.mxu0 0.0
    %576 = vmatpush2.msra.mxu0 0.0
    %577 = vmatprep.subr.mxu0 0.0
    %578 = vmatpush2.msra.mxu0 0.0
    %579 = vmatprep.subr.mxu0 0.0
    %580 = vmatpush2.msra.mxu0 0.0
    %581 = vmatprep.subr.mxu0 0.0
    %582 = vmatpush2.msra.mxu0 0.0
    %583 = vmatprep.subr.mxu0 0.0
    %584 = vmatpush2.msra.mxu0 0.0
    %585 = vmatprep.subr.mxu0 0.0
    %586 = vmatpush2.msra.mxu0 0.0
    %587 = vmatprep.subr.mxu0 0.0
    %588 = vmatpush2.msra.mxu0 0.0
    %589 = vmatprep.subr.mxu0 0.0
    %590 = vmatpush2.msra.mxu0 0.0
    %591 = vmatprep.subr.mxu0 0.0
    %592 = vmatpush2.msra.mxu0 0.0
    %593 = vmatprep.subr.mxu0 0.0
    %594 = vmatpush2.msra.mxu0 0.0
    %595 = vmatprep.subr.mxu0 0.0
    %596 = vmatpush2.msra.mxu0 0.0
    %597 = vmatprep.mubr.f32.mxu0 0.0
    %v598 = vand.u32 %v67, 4294901760
    %599 = vmatmul.mubr.f32.gmra.mxu0 %v598
    %v600 = vpop.f32.mrf.mxu0
    %v601 = vadd.f32 %v518, %v600
    %v602 = vpop.f32.mrf.mxu0
    %v603 = vadd.f32 %v520, %v602
    %604 = vmatprep.mubr.f32.mxu0 0.0
    %v605 = vand.u32 %v70, 4294901760
    %606 = vmatmul.mubr.f32.gmra.mxu0 %v605
    %v607 = vpop.f32.mrf.mxu0
    %v608 = vadd.f32 %v525, %v607
    %v609 = vpop.f32.mrf.mxu0
    %v610 = vadd.f32 %v527, %v609
    %611 = vdwg.mxu0
    %612 = vmatprep.subr.mxu0 0.0
    %613 = vmatpush1.msra.mxu0 0.0
    %614 = vmatprep.subr.mxu0 0.0
    %615 = vmatpush1.msra.mxu0 0.0
    %616 = vmatprep.subr.mxu0 0.0
    %617 = vmatpush1.msra.mxu0 0.0
    %618 = vmatprep.subr.mxu0 0.0
    %619 = vmatpush1.msra.mxu0 0.0
    %620 = vmatprep.subr.mxu0 0.0
    %621 = vmatpush1.msra.mxu0 0.0
    %622 = vmatprep.subr.mxu0 0.0
    %623 = vmatpush1.msra.mxu0 0.0
    %624 = vmatprep.subr.mxu0 0.0
    %625 = vmatpush1.msra.mxu0 0.0
    %626 = vmatprep.subr.mxu0 0.0
    %627 = vmatpush1.msra.mxu0 0.0
    %628 = vmatprep.subr.mxu0 0.0
    %629 = vmatpush1.msra.mxu0 0.0
    %630 = vmatprep.subr.mxu0 0.0
    %631 = vmatpush1.msra.mxu0 0.0
    %632 = vmatprep.subr.mxu0 0.0
    %633 = vmatpush1.msra.mxu0 0.0
    %634 = vmatprep.subr.mxu0 0.0
    %635 = vmatpush1.msra.mxu0 0.0
    %636 = vmatprep.subr.mxu0 0.0
    %637 = vmatpush1.msra.mxu0 0.0
    %638 = vmatprep.subr.mxu0 0.0
    %639 = vmatpush1.msra.mxu0 0.0
    %640 = vmatprep.subr.mxu0 0.0
    %v641 = vand.u32 %v64, 4294901760
    %642 = vmatpush1.msra.mxu0 %v641
    %643 = vmatprep.subr.mxu0 0.0
    %v644 = vand.u32 %v61, 4294901760
    %645 = vmatpush1.msra.mxu0 %v644
    %646 = vmatprep.subr.mxu0 0.0
    %647 = vmatpush2.msra.mxu0 0.0
    %648 = vmatprep.subr.mxu0 0.0
    %649 = vmatpush2.msra.mxu0 0.0
    %650 = vmatprep.subr.mxu0 0.0
    %651 = vmatpush2.msra.mxu0 0.0
    %652 = vmatprep.subr.mxu0 0.0
    %653 = vmatpush2.msra.mxu0 0.0
    %654 = vmatprep.subr.mxu0 0.0
    %655 = vmatpush2.msra.mxu0 0.0
    %656 = vmatprep.subr.mxu0 0.0
    %657 = vmatpush2.msra.mxu0 0.0
    %658 = vmatprep.subr.mxu0 0.0
    %659 = vmatpush2.msra.mxu0 0.0
    %660 = vmatprep.subr.mxu0 0.0
    %661 = vmatpush2.msra.mxu0 0.0
    %662 = vmatprep.subr.mxu0 0.0
    %663 = vmatpush2.msra.mxu0 0.0
    %664 = vmatprep.subr.mxu0 0.0
    %665 = vmatpush2.msra.mxu0 0.0
    %666 = vmatprep.subr.mxu0 0.0
    %667 = vmatpush2.msra.mxu0 0.0
    %668 = vmatprep.subr.mxu0 0.0
    %669 = vmatpush2.msra.mxu0 0.0
    %670 = vmatprep.subr.mxu0 0.0
    %671 = vmatpush2.msra.mxu0 0.0
    %672 = vmatprep.subr.mxu0 0.0
    %673 = vmatpush2.msra.mxu0 0.0
    %674 = vmatprep.subr.mxu0 0.0
    %675 = vmatpush2.msra.mxu0 0.0
    %676 = vmatprep.subr.mxu0 0.0
    %677 = vmatpush2.msra.mxu0 0.0
    %678 = vmatprep.mubr.f32.mxu0 0.0
    %v679 = vand.u32 %v67, 4294901760
    %v680 = vsub.f32 %v67, %v679
    %v681 = vand.u32 %v680, 4294901760
    %v682 = vsub.f32 %v680, %v681
    %v683 = vand.u32 %v682, 4294901760
    %684 = vmatmul.mubr.f32.gmra.mxu0 %v683
    %v685 = vpop.f32.mrf.mxu0
    %v686 = vadd.f32 0.0, %v685
    %v687 = vpop.f32.mrf.mxu0
    %688 = vmatprep.mubr.f32.mxu0 0.0
    %v689 = vand.u32 %v70, 4294901760
    %v690 = vsub.f32 %v70, %v689
    %v691 = vand.u32 %v690, 4294901760
    %v692 = vsub.f32 %v690, %v691
    %v693 = vand.u32 %v692, 4294901760
    %694 = vmatmul.mubr.f32.gmra.mxu0 %v693
    %v695 = vpop.f32.mrf.mxu0
    %v696 = vadd.f32 0.0, %v695
    %v697 = vpop.f32.mrf.mxu0
    %698 = vdwg.mxu0
    %699 = vmatprep.subr.mxu0 0.0
    %700 = vmatpush1.msra.mxu0 0.0
    %701 = vmatprep.subr.mxu0 0.0
    %702 = vmatpush1.msra.mxu0 0.0
    %703 = vmatprep.subr.mxu0 0.0
    %704 = vmatpush1.msra.mxu0 0.0
    %705 = vmatprep.subr.mxu0 0.0
    %706 = vmatpush1.msra.mxu0 0.0
    %707 = vmatprep.subr.mxu0 0.0
    %708 = vmatpush1.msra.mxu0 0.0
    %709 = vmatprep.subr.mxu0 0.0
    %710 = vmatpush1.msra.mxu0 0.0
    %711 = vmatprep.subr.mxu0 0.0
    %712 = vmatpush1.msra.mxu0 0.0
    %713 = vmatprep.subr.mxu0 0.0
    %714 = vmatpush1.msra.mxu0 0.0
    %715 = vmatprep.subr.mxu0 0.0
    %716 = vmatpush1.msra.mxu0 0.0
    %717 = vmatprep.subr.mxu0 0.0
    %718 = vmatpush1.msra.mxu0 0.0
    %719 = vmatprep.subr.mxu0 0.0
    %720 = vmatpush1.msra.mxu0 0.0
    %721 = vmatprep.subr.mxu0 0.0
    %722 = vmatpush1.msra.mxu0 0.0
    %723 = vmatprep.subr.mxu0 0.0
    %724 = vmatpush1.msra.mxu0 0.0
    %725 = vmatprep.subr.mxu0 0.0
    %726 = vmatpush1.msra.mxu0 0.0
    %727 = vmatprep.subr.mxu0 0.0
    %v728 = vand.u32 %v64, 4294901760
    %v729 = vsub.f32 %v64, %v728
    %v730 = vand.u32 %v729, 4294901760
    %v731 = vsub.f32 %v729, %v730
    %v732 = vand.u32 %v731, 4294901760
    %733 = vmatpush1.msra.mxu0 %v732
    %734 = vmatprep.subr.mxu0 0.0
    %v735 = vand.u32 %v61, 4294901760
    %v736 = vsub.f32 %v61, %v735
    %v737 = vand.u32 %v736, 4294901760
    %v738 = vsub.f32 %v736, %v737
    %v739 = vand.u32 %v738, 4294901760
    %740 = vmatpush1.msra.mxu0 %v739
    %741 = vmatprep.subr.mxu0 0.0
    %742 = vmatpush2.msra.mxu0 0.0
    %743 = vmatprep.subr.mxu0 0.0
    %744 = vmatpush2.msra.mxu0 0.0
    %745 = vmatprep.subr.mxu0 0.0
    %746 = vmatpush2.msra.mxu0 0.0
    %747 = vmatprep.subr.mxu0 0.0
    %748 = vmatpush2.msra.mxu0 0.0
    %749 = vmatprep.subr.mxu0 0.0
    %750 = vmatpush2.msra.mxu0 0.0
    %751 = vmatprep.subr.mxu0 0.0
    %752 = vmatpush2.msra.mxu0 0.0
    %753 = vmatprep.subr.mxu0 0.0
    %754 = vmatpush2.msra.mxu0 0.0
    %755 = vmatprep.subr.mxu0 0.0
    %756 = vmatpush2.msra.mxu0 0.0
    %757 = vmatprep.subr.mxu0 0.0
    %758 = vmatpush2.msra.mxu0 0.0
    %759 = vmatprep.subr.mxu0 0.0
    %760 = vmatpush2.msra.mxu0 0.0
    %761 = vmatprep.subr.mxu0 0.0
    %762 = vmatpush2.msra.mxu0 0.0
    %763 = vmatprep.subr.mxu0 0.0
    %764 = vmatpush2.msra.mxu0 0.0
    %765 = vmatprep.subr.mxu0 0.0
    %766 = vmatpush2.msra.mxu0 0.0
    %767 = vmatprep.subr.mxu0 0.0
    %768 = vmatpush2.msra.mxu0 0.0
    %769 = vmatprep.subr.mxu0 0.0
    %770 = vmatpush2.msra.mxu0 0.0
    %771 = vmatprep.subr.mxu0 0.0
    %772 = vmatpush2.msra.mxu0 0.0
    %773 = vmatprep.mubr.f32.mxu0 0.0
    %v774 = vand.u32 %v67, 4294901760
    %775 = vmatmul.mubr.f32.gmra.mxu0 %v774
    %v776 = vpop.f32.mrf.mxu0
    %v777 = vadd.f32 %v686, %v776
    %v778 = vpop.f32.mrf.mxu0
    %779 = vmatprep.mubr.f32.mxu0 0.0
    %v780 = vand.u32 %v70, 4294901760
    %781 = vmatmul.mubr.f32.gmra.mxu0 %v780
    %v782 = vpop.f32.mrf.mxu0
    %v783 = vadd.f32 %v696, %v782
    %v784 = vpop.f32.mrf.mxu0
    %785 = vdwg.mxu0
    %786 = vmatprep.subr.mxu0 0.0
    %787 = vmatpush1.msra.mxu0 0.0
    %788 = vmatprep.subr.mxu0 0.0
    %789 = vmatpush1.msra.mxu0 0.0
    %790 = vmatprep.subr.mxu0 0.0
    %791 = vmatpush1.msra.mxu0 0.0
    %792 = vmatprep.subr.mxu0 0.0
    %793 = vmatpush1.msra.mxu0 0.0
    %794 = vmatprep.subr.mxu0 0.0
    %795 = vmatpush1.msra.mxu0 0.0
    %796 = vmatprep.subr.mxu0 0.0
    %797 = vmatpush1.msra.mxu0 0.0
    %798 = vmatprep.subr.mxu0 0.0
    %799 = vmatpush1.msra.mxu0 0.0
    %800 = vmatprep.subr.mxu0 0.0
    %801 = vmatpush1.msra.mxu0 0.0
    %802 = vmatprep.subr.mxu0 0.0
    %803 = vmatpush1.msra.mxu0 0.0
    %804 = vmatprep.subr.mxu0 0.0
    %805 = vmatpush1.msra.mxu0 0.0
    %806 = vmatprep.subr.mxu0 0.0
    %807 = vmatpush1.msra.mxu0 0.0
    %808 = vmatprep.subr.mxu0 0.0
    %809 = vmatpush1.msra.mxu0 0.0
    %810 = vmatprep.subr.mxu0 0.0
    %811 = vmatpush1.msra.mxu0 0.0
    %812 = vmatprep.subr.mxu0 0.0
    %813 = vmatpush1.msra.mxu0 0.0
    %814 = vmatprep.subr.mxu0 0.0
    %v815 = vand.u32 %v64, 4294901760
    %v816 = vsub.f32 %v64, %v815
    %817 = vmatpush1.msra.mxu0 %v816
    %818 = vmatprep.subr.mxu0 0.0
    %v819 = vand.u32 %v61, 4294901760
    %v820 = vsub.f32 %v61, %v819
    %821 = vmatpush1.msra.mxu0 %v820
    %822 = vmatprep.subr.mxu0 0.0
    %823 = vmatpush2.msra.mxu0 0.0
    %824 = vmatprep.subr.mxu0 0.0
    %825 = vmatpush2.msra.mxu0 0.0
    %826 = vmatprep.subr.mxu0 0.0
    %827 = vmatpush2.msra.mxu0 0.0
    %828 = vmatprep.subr.mxu0 0.0
    %829 = vmatpush2.msra.mxu0 0.0
    %830 = vmatprep.subr.mxu0 0.0
    %831 = vmatpush2.msra.mxu0 0.0
    %832 = vmatprep.subr.mxu0 0.0
    %833 = vmatpush2.msra.mxu0 0.0
    %834 = vmatprep.subr.mxu0 0.0
    %835 = vmatpush2.msra.mxu0 0.0
    %836 = vmatprep.subr.mxu0 0.0
    %837 = vmatpush2.msra.mxu0 0.0
    %838 = vmatprep.subr.mxu0 0.0
    %839 = vmatpush2.msra.mxu0 0.0
    %840 = vmatprep.subr.mxu0 0.0
    %841 = vmatpush2.msra.mxu0 0.0
    %842 = vmatprep.subr.mxu0 0.0
    %843 = vmatpush2.msra.mxu0 0.0
    %844 = vmatprep.subr.mxu0 0.0
    %845 = vmatpush2.msra.mxu0 0.0
    %846 = vmatprep.subr.mxu0 0.0
    %847 = vmatpush2.msra.mxu0 0.0
    %848 = vmatprep.subr.mxu0 0.0
    %849 = vmatpush2.msra.mxu0 0.0
    %850 = vmatprep.subr.mxu0 0.0
    %851 = vmatpush2.msra.mxu0 0.0
    %852 = vmatprep.subr.mxu0 0.0
    %853 = vmatpush2.msra.mxu0 0.0
    %854 = vmatprep.mubr.f32.mxu0 0.0
    %v855 = vand.u32 %v67, 4294901760
    %v856 = vsub.f32 %v67, %v855
    %857 = vmatmul.mubr.f32.gmra.mxu0 %v856
    %v858 = vpop.f32.mrf.mxu0
    %v859 = vadd.f32 %v777, %v858
    %v860 = vpop.f32.mrf.mxu0
    %861 = vmatprep.mubr.f32.mxu0 0.0
    %v862 = vand.u32 %v70, 4294901760
    %v863 = vsub.f32 %v70, %v862
    %864 = vmatmul.mubr.f32.gmra.mxu0 %v863
    %v865 = vpop.f32.mrf.mxu0
    %v866 = vadd.f32 %v783, %v865
    %v867 = vpop.f32.mrf.mxu0
    %868 = vdwg.mxu0
    %869 = vmatprep.subr.mxu0 0.0
    %870 = vmatpush1.msra.mxu0 0.0
    %871 = vmatprep.subr.mxu0 0.0
    %872 = vmatpush1.msra.mxu0 0.0
    %873 = vmatprep.subr.mxu0 0.0
    %874 = vmatpush1.msra.mxu0 0.0
    %875 = vmatprep.subr.mxu0 0.0
    %876 = vmatpush1.msra.mxu0 0.0
    %877 = vmatprep.subr.mxu0 0.0
    %878 = vmatpush1.msra.mxu0 0.0
    %879 = vmatprep.subr.mxu0 0.0
    %880 = vmatpush1.msra.mxu0 0.0
    %881 = vmatprep.subr.mxu0 0.0
    %882 = vmatpush1.msra.mxu0 0.0
    %883 = vmatprep.subr.mxu0 0.0
    %884 = vmatpush1.msra.mxu0 0.0
    %885 = vmatprep.subr.mxu0 0.0
    %886 = vmatpush1.msra.mxu0 0.0
    %887 = vmatprep.subr.mxu0 0.0
    %888 = vmatpush1.msra.mxu0 0.0
    %889 = vmatprep.subr.mxu0 0.0
    %890 = vmatpush1.msra.mxu0 0.0
    %891 = vmatprep.subr.mxu0 0.0
    %892 = vmatpush1.msra.mxu0 0.0
    %893 = vmatprep.subr.mxu0 0.0
    %894 = vmatpush1.msra.mxu0 0.0
    %895 = vmatprep.subr.mxu0 0.0
    %896 = vmatpush1.msra.mxu0 0.0
    %897 = vmatprep.subr.mxu0 0.0
    %v898 = vand.u32 %v64, 4294901760
    %899 = vmatpush1.msra.mxu0 %v898
    %900 = vmatprep.subr.mxu0 0.0
    %v901 = vand.u32 %v61, 4294901760
    %902 = vmatpush1.msra.mxu0 %v901
    %903 = vmatprep.subr.mxu0 0.0
    %904 = vmatpush2.msra.mxu0 0.0
    %905 = vmatprep.subr.mxu0 0.0
    %906 = vmatpush2.msra.mxu0 0.0
    %907 = vmatprep.subr.mxu0 0.0
    %908 = vmatpush2.msra.mxu0 0.0
    %909 = vmatprep.subr.mxu0 0.0
    %910 = vmatpush2.msra.mxu0 0.0
    %911 = vmatprep.subr.mxu0 0.0
    %912 = vmatpush2.msra.mxu0 0.0
    %913 = vmatprep.subr.mxu0 0.0
    %914 = vmatpush2.msra.mxu0 0.0
    %915 = vmatprep.subr.mxu0 0.0
    %916 = vmatpush2.msra.mxu0 0.0
    %917 = vmatprep.subr.mxu0 0.0
    %918 = vmatpush2.msra.mxu0 0.0
    %919 = vmatprep.subr.mxu0 0.0
    %920 = vmatpush2.msra.mxu0 0.0
    %921 = vmatprep.subr.mxu0 0.0
    %922 = vmatpush2.msra.mxu0 0.0
    %923 = vmatprep.subr.mxu0 0.0
    %924 = vmatpush2.msra.mxu0 0.0
    %925 = vmatprep.subr.mxu0 0.0
    %926 = vmatpush2.msra.mxu0 0.0
    %927 = vmatprep.subr.mxu0 0.0
    %928 = vmatpush2.msra.mxu0 0.0
    %929 = vmatprep.subr.mxu0 0.0
    %930 = vmatpush2.msra.mxu0 0.0
    %931 = vmatprep.subr.mxu0 0.0
    %932 = vmatpush2.msra.mxu0 0.0
    %933 = vmatprep.subr.mxu0 0.0
    %934 = vmatpush2.msra.mxu0 0.0
    %935 = vmatprep.mubr.f32.mxu0 0.0
    %v936 = vand.u32 %v67, 4294901760
    %v937 = vsub.f32 %v67, %v936
    %v938 = vand.u32 %v937, 4294901760
    %939 = vmatmul.mubr.f32.gmra.mxu0 %v938
    %v940 = vpop.f32.mrf.mxu0
    %v941 = vadd.f32 %v859, %v940
    %v942 = vpop.f32.mrf.mxu0
    %943 = vmatprep.mubr.f32.mxu0 0.0
    %v944 = vand.u32 %v70, 4294901760
    %v945 = vsub.f32 %v70, %v944
    %v946 = vand.u32 %v945, 4294901760
    %947 = vmatmul.mubr.f32.gmra.mxu0 %v946
    %v948 = vpop.f32.mrf.mxu0
    %v949 = vadd.f32 %v866, %v948
    %v950 = vpop.f32.mrf.mxu0
    %951 = vdwg.mxu0
    %952 = vmatprep.subr.mxu0 0.0
    %953 = vmatpush1.msra.mxu0 0.0
    %954 = vmatprep.subr.mxu0 0.0
    %955 = vmatpush1.msra.mxu0 0.0
    %956 = vmatprep.subr.mxu0 0.0
    %957 = vmatpush1.msra.mxu0 0.0
    %958 = vmatprep.subr.mxu0 0.0
    %959 = vmatpush1.msra.mxu0 0.0
    %960 = vmatprep.subr.mxu0 0.0
    %961 = vmatpush1.msra.mxu0 0.0
    %962 = vmatprep.subr.mxu0 0.0
    %963 = vmatpush1.msra.mxu0 0.0
    %964 = vmatprep.subr.mxu0 0.0
    %965 = vmatpush1.msra.mxu0 0.0
    %966 = vmatprep.subr.mxu0 0.0
    %967 = vmatpush1.msra.mxu0 0.0
    %968 = vmatprep.subr.mxu0 0.0
    %969 = vmatpush1.msra.mxu0 0.0
    %970 = vmatprep.subr.mxu0 0.0
    %971 = vmatpush1.msra.mxu0 0.0
    %972 = vmatprep.subr.mxu0 0.0
    %973 = vmatpush1.msra.mxu0 0.0
    %974 = vmatprep.subr.mxu0 0.0
    %975 = vmatpush1.msra.mxu0 0.0
    %976 = vmatprep.subr.mxu0 0.0
    %977 = vmatpush1.msra.mxu0 0.0
    %978 = vmatprep.subr.mxu0 0.0
    %979 = vmatpush1.msra.mxu0 0.0
    %980 = vmatprep.subr.mxu0 0.0
    %v981 = vand.u32 %v64, 4294901760
    %v982 = vsub.f32 %v64, %v981
    %v983 = vand.u32 %v982, 4294901760
    %984 = vmatpush1.msra.mxu0 %v983
    %985 = vmatprep.subr.mxu0 0.0
    %v986 = vand.u32 %v61, 4294901760
    %v987 = vsub.f32 %v61, %v986
    %v988 = vand.u32 %v987, 4294901760
    %989 = vmatpush1.msra.mxu0 %v988
    %990 = vmatprep.subr.mxu0 0.0
    %991 = vmatpush2.msra.mxu0 0.0
    %992 = vmatprep.subr.mxu0 0.0
    %993 = vmatpush2.msra.mxu0 0.0
    %994 = vmatprep.subr.mxu0 0.0
    %995 = vmatpush2.msra.mxu0 0.0
    %996 = vmatprep.subr.mxu0 0.0
    %997 = vmatpush2.msra.mxu0 0.0
    %998 = vmatprep.subr.mxu0 0.0
    %999 = vmatpush2.msra.mxu0 0.0
    %1000 = vmatprep.subr.mxu0 0.0
    %1001 = vmatpush2.msra.mxu0 0.0
    %1002 = vmatprep.subr.mxu0 0.0
    %1003 = vmatpush2.msra.mxu0 0.0
    %1004 = vmatprep.subr.mxu0 0.0
    %1005 = vmatpush2.msra.mxu0 0.0
    %1006 = vmatprep.subr.mxu0 0.0
    %1007 = vmatpush2.msra.mxu0 0.0
    %1008 = vmatprep.subr.mxu0 0.0
    %1009 = vmatpush2.msra.mxu0 0.0
    %1010 = vmatprep.subr.mxu0 0.0
    %1011 = vmatpush2.msra.mxu0 0.0
    %1012 = vmatprep.subr.mxu0 0.0
    %1013 = vmatpush2.msra.mxu0 0.0
    %1014 = vmatprep.subr.mxu0 0.0
    %1015 = vmatpush2.msra.mxu0 0.0
    %1016 = vmatprep.subr.mxu0 0.0
    %1017 = vmatpush2.msra.mxu0 0.0
    %1018 = vmatprep.subr.mxu0 0.0
    %1019 = vmatpush2.msra.mxu0 0.0
    %1020 = vmatprep.subr.mxu0 0.0
    %1021 = vmatpush2.msra.mxu0 0.0
    %1022 = vmatprep.mubr.f32.mxu0 0.0
    %v1023 = vand.u32 %v67, 4294901760
    %1024 = vmatmul.mubr.f32.gmra.mxu0 %v1023
    %v1025 = vpop.f32.mrf.mxu0
    %v1026 = vadd.f32 %v941, %v1025
    %v1027 = vpop.f32.mrf.mxu0
    %1028 = vmatprep.mubr.f32.mxu0 0.0
    %v1029 = vand.u32 %v70, 4294901760
    %1030 = vmatmul.mubr.f32.gmra.mxu0 %v1029
    %v1031 = vpop.f32.mrf.mxu0
    %v1032 = vadd.f32 %v949, %v1031
    %v1033 = vpop.f32.mrf.mxu0
    %1034 = vdwg.mxu0
    %1035 = vmatprep.subr.mxu0 0.0
    %1036 = vmatpush1.msra.mxu0 0.0
    %1037 = vmatprep.subr.mxu0 0.0
    %1038 = vmatpush1.msra.mxu0 0.0
    %1039 = vmatprep.subr.mxu0 0.0
    %1040 = vmatpush1.msra.mxu0 0.0
    %1041 = vmatprep.subr.mxu0 0.0
    %1042 = vmatpush1.msra.mxu0 0.0
    %1043 = vmatprep.subr.mxu0 0.0
    %1044 = vmatpush1.msra.mxu0 0.0
    %1045 = vmatprep.subr.mxu0 0.0
    %1046 = vmatpush1.msra.mxu0 0.0
    %1047 = vmatprep.subr.mxu0 0.0
    %1048 = vmatpush1.msra.mxu0 0.0
    %1049 = vmatprep.subr.mxu0 0.0
    %1050 = vmatpush1.msra.mxu0 0.0
    %1051 = vmatprep.subr.mxu0 0.0
    %1052 = vmatpush1.msra.mxu0 0.0
    %1053 = vmatprep.subr.mxu0 0.0
    %1054 = vmatpush1.msra.mxu0 0.0
    %1055 = vmatprep.subr.mxu0 0.0
    %1056 = vmatpush1.msra.mxu0 0.0
    %1057 = vmatprep.subr.mxu0 0.0
    %1058 = vmatpush1.msra.mxu0 0.0
    %1059 = vmatprep.subr.mxu0 0.0
    %1060 = vmatpush1.msra.mxu0 0.0
    %1061 = vmatprep.subr.mxu0 0.0
    %1062 = vmatpush1.msra.mxu0 0.0
    %1063 = vmatprep.subr.mxu0 0.0
    %v1064 = vand.u32 %v64, 4294901760
    %1065 = vmatpush1.msra.mxu0 %v1064
    %1066 = vmatprep.subr.mxu0 0.0
    %v1067 = vand.u32 %v61, 4294901760
    %1068 = vmatpush1.msra.mxu0 %v1067
    %1069 = vmatprep.subr.mxu0 0.0
    %1070 = vmatpush2.msra.mxu0 0.0
    %1071 = vmatprep.subr.mxu0 0.0
    %1072 = vmatpush2.msra.mxu0 0.0
    %1073 = vmatprep.subr.mxu0 0.0
    %1074 = vmatpush2.msra.mxu0 0.0
    %1075 = vmatprep.subr.mxu0 0.0
    %1076 = vmatpush2.msra.mxu0 0.0
    %1077 = vmatprep.subr.mxu0 0.0
    %1078 = vmatpush2.msra.mxu0 0.0
    %1079 = vmatprep.subr.mxu0 0.0
    %1080 = vmatpush2.msra.mxu0 0.0
    %1081 = vmatprep.subr.mxu0 0.0
    %1082 = vmatpush2.msra.mxu0 0.0
    %1083 = vmatprep.subr.mxu0 0.0
    %1084 = vmatpush2.msra.mxu0 0.0
    %1085 = vmatprep.subr.mxu0 0.0
    %1086 = vmatpush2.msra.mxu0 0.0
    %1087 = vmatprep.subr.mxu0 0.0
    %1088 = vmatpush2.msra.mxu0 0.0
    %1089 = vmatprep.subr.mxu0 0.0
    %1090 = vmatpush2.msra.mxu0 0.0
    %1091 = vmatprep.subr.mxu0 0.0
    %1092 = vmatpush2.msra.mxu0 0.0
    %1093 = vmatprep.subr.mxu0 0.0
    %1094 = vmatpush2.msra.mxu0 0.0
    %1095 = vmatprep.subr.mxu0 0.0
    %1096 = vmatpush2.msra.mxu0 0.0
    %1097 = vmatprep.subr.mxu0 0.0
    %1098 = vmatpush2.msra.mxu0 0.0
    %1099 = vmatprep.subr.mxu0 0.0
    %1100 = vmatpush2.msra.mxu0 0.0
    %1101 = vmatprep.mubr.f32.mxu0 0.0
    %v1102 = vand.u32 %v67, 4294901760
    %1103 = vmatmul.mubr.f32.gmra.mxu0 %v1102
    %v1104 = vpop.f32.mrf.mxu0
    %v1105 = vadd.f32 %v1026, %v1104
    %v1106 = vpop.f32.mrf.mxu0
    %1107 = vmatprep.mubr.f32.mxu0 0.0
    %v1108 = vand.u32 %v70, 4294901760
    %1109 = vmatmul.mubr.f32.gmra.mxu0 %v1108
    %v1110 = vpop.f32.mrf.mxu0
    %v1111 = vadd.f32 %v1032, %v1110
    %v1112 = vpop.f32.mrf.mxu0
    %1113 = vdwg.mxu0
    %v1114 = vld [vmem:[%s2] sm:$0x7]
    %v1116 = vlaneseq
    %v1117 = vshrl.u32 %v1116, 7
    %v1118 = vsub.s32 0, %v1117
    %v1119 = vrot.slane %v1114, %v1118
    %v1120 = vlaneseq
    %v1121 = vshrl.u32 %v1120, 7
    %v1122 = vsub.s32 1, %v1121
    %v1123 = vrot.slane %v1114, %v1122
    %v1124 = vlaneseq
    %v1125 = vshrl.u32 %v1124, 7
    %v1126 = vsub.s32 2, %v1125
    %v1127 = vrot.slane %v1114, %v1126
    %v1131 = vmul.f32 %v601, %v1119
    %v1132 = vmul.f32 %v603, %v1123
    %v1133 = vmul.f32 %v1105, %v1127
    %v1134 = vmul.f32 %v608, %v1119
    %v1135 = vmul.f32 %v610, %v1123
    %v1136 = vmul.f32 %v1111, %v1127
    %v1137 = vld [vmem:[#allocation7] sm:$0x7]
    %v1139 = vlaneseq
    %v1140 = vshrl.u32 %v1139, 7
    %v1141 = vsub.s32 0, %v1140
    %v1142 = vrot.slane %v1137, %v1141
    %v1143 = vlaneseq
    %v1144 = vshrl.u32 %v1143, 7
    %v1145 = vsub.s32 1, %v1144
    %v1146 = vrot.slane %v1137, %v1145
    %v1147 = vlaneseq
    %v1148 = vshrl.u32 %v1147, 7
    %v1149 = vsub.s32 2, %v1148
    %v1150 = vrot.slane %v1137, %v1149
    %v1154 = vadd.f32 %v1131, %v1142
    %v1155 = vadd.f32 %v1132, %v1146
    %v1156 = vadd.f32 %v1133, %v1150
    %v1157 = vadd.f32 %v1134, %v1142
    %v1158 = vadd.f32 %v1135, %v1146
    %v1159 = vadd.f32 %v1136, %v1150
    %v1160 = vand.u32 2147483647, %v1154
    %vm1161 = vcmp.le.f32.partialorder %v1160, 0.7853982
    %vm1162 = vcmp.lt.s32.totalorder %v1154, 0
    %v1163 = vand.u32 %v1154, 2139095040
    %v1164 = vshrl.u32 %v1163, 23
    %v1165 = vsub.s32 %v1164, 127
    %v1166 = vand.u32 2147483647, %v1154
    %v1167 = vand.u32 %v1166, 8388607
    %v1168 = vor.u32 %v1167, 8388608
    %v1169 = vsub.s32 0, %v1168
    %v1170 = vadd.s32 %v1165, 1
    %vm1171 = vcmp.gt.s32.totalorder %v1170, 0
    %v1172 = vsel %vm1171, %v1170, 0
    %v1173 = vshrl.u32 %v1172, 5
    %v1174 = vand.u32 %v1172, 31
    %v1175 = vsub.s32 32, %v1174
    %v1176 = vshrl.u32 683565275, %v1175
    %v1177 = vshll.u32 683565275, %v1174
    %v1178 = vshrl.u32 2475754826, %v1175
    %v1179 = vor.u32 %v1177, %v1178
    %v1180 = vshll.u32 2475754826, %v1174
    %v1181 = vshrl.u32 2131351028, %v1175
    %v1182 = vor.u32 %v1180, %v1181
    %v1183 = vshll.u32 2131351028, %v1174
    %v1184 = vshrl.u32 2102212464, %v1175
    %v1185 = vor.u32 %v1183, %v1184
    %v1186 = vshll.u32 2102212464, %v1174
    %v1187 = vshrl.u32 920167782, %v1175
    %v1188 = vor.u32 %v1186, %v1187
    %v1189 = vshll.u32 920167782, %v1174
    %v1190 = vshrl.u32 1326507024, %v1175
    %v1191 = vor.u32 %v1189, %v1190
    %vm1192 = vcmp.lt.s32.totalorder %v1173, 1
    %vm1193 = vcmp.lt.s32.totalorder %v1173, 2
    %vm1194 = vcmp.lt.s32.totalorder %v1173, 3
    %vm1195 = vcmp.lt.s32.totalorder %v1173, 4
    %v1196 = vsel %vm1192, %v1176, %v1179
    %v1197 = vsel %vm1195, %v1185, 2102212464
    %v1198 = vsel %vm1194, %v1182, %v1197
    %v1199 = vsel %vm1193, %v1196, %v1198
    %v1200 = vsel %vm1192, %v1179, %v1182
    %v1201 = vsel %vm1195, %v1188, 920167782
    %v1202 = vsel %vm1194, %v1185, %v1201
    %v1203 = vsel %vm1193, %v1200, %v1202
    %v1204 = vsel %vm1192, %v1182, %v1185
    %v1205 = vsel %vm1195, %v1191, 1326507024
    %v1206 = vsel %vm1194, %v1188, %v1205
    %v1207 = vsel %vm1193, %v1204, %v1206
    %v1208 = vshll.u32 %v1168, 8
    %v1209 = vmul.u32.u64.compose %v1208, %v1207
    %v1210 = vextract.low.u32 %v1209
    %v1211 = vextract.high.u32 %v1209
    %v1212 = vmul.u32.u64.compose %v1208, %v1203
    %v1213 = vextract.low.u32 %v1212
    %v1214 = vextract.high.u32 %v1212
    %v1215 = vmul.u32 %v1208, %v1199
    %v1216 = vadd.s32 %v1211, %v1213
    %vm1217 = vc.u32 %v1211, %v1213
    %v1218 = vadd.s32 %v1214, 1
    %v1219 = vsel %vm1217, %v1218, %v1214
    %v1220 = vadd.s32 %v1215, %v1219
    %v1221 = vadd.s32 %v1220, 536870912
    %v1222 = vshrl.u32 %v1221, 30
    %v1223 = vshll.u32 %v1222, 30
    %v1224 = vsub.s32 %v1220, %v1223
    %vm1225 = vcmp.lt.s32.totalorder %v1224, 0
    %v1226 = vsub.s32 0, %v1224
    %v1227 = vsel %vm1225, %v1226, %v1224
    %v1228 = vclz %v1227
    %v1229 = vsub.s32 %v1228, 2
    %vm1230 = vcmp.gt.s32.totalorder 0, %v1229
    %v1231 = vsel %vm1230, 0, %v1229
    %v1232 = vsub.s32 32, %v1231
    %v1233 = vshll.u32 %v1224, %v1231
    %v1234 = vshrl.u32 %v1216, %v1232
    %v1235 = vor.u32 %v1233, %v1234
    %v1236 = vsub.s32 4294967266, %v1231
    %v1237 = vadd.s32 %v1236, 127
    %v1238 = vshll.u32 %v1237, 23
    %v1239 = vor.u32 4788187, %v1238
    %v1240 = vand.u32 2147483647, %v1239
    %v1242 = vcvt.s32.f32 %v1235
    %v1243 = vmul.f32 %v1242, %v1240
    %v1244 = vxor.u32 %v1243, 2147483648
    %v1245 = vsel %vm1162, %v1244, %v1243
    %v1246 = vsub.s32 4, %v1222
    %v1247 = vsel %vm1162, %v1246, %v1222
    %v1248 = vsel %vm1161, %v1154, %v1245
    %v1249 = vsel %vm1161, 0, %v1247
    %v1250 = vcosq.f32.pop %v1248
    %v1251 = vsinq.f32.pop %v1248
    %vm1252 = vweird.f32 %v1154
    %v1253 = vadd.s32 %v1249, 3
    %v1254 = vand.u32 %v1253, 3
    %vm1255 = vcmp.lt.s32.totalorder %v1254, 2
    %vm1256 = vcmp.eq.s32.totalorder %v1254, 0
    %v1257 = vxor.u32 %v1251, 2147483648
    %v1258 = vsel %vm1256, %v1250, %v1257
    %vm1259 = vcmp.eq.s32.totalorder %v1254, 2
    %v1260 = vxor.u32 %v1250, 2147483648
    %v1261 = vsel %vm1259, %v1260, %v1251
    %v1262 = vsel %vm1255, %v1258, %v1261
    %v1263 = vsel %vm1252, nan, %v1262
    %v1264 = vand.u32 2147483647, %v1155
    %vm1265 = vcmp.le.f32.partialorder %v1264, 0.7853982
    %vm1266 = vcmp.lt.s32.totalorder %v1155, 0
    %v1267 = vand.u32 %v1155, 2139095040
    %v1268 = vshrl.u32 %v1267, 23
    %v1269 = vsub.s32 %v1268, 127
    %v1270 = vand.u32 2147483647, %v1155
    %v1271 = vand.u32 %v1270, 8388607
    %v1272 = vor.u32 %v1271, 8388608
    %v1273 = vsub.s32 0, %v1272
    %v1274 = vadd.s32 %v1269, 1
    %vm1275 = vcmp.gt.s32.totalorder %v1274, 0
    %v1276 = vsel %vm1275, %v1274, 0
    %v1277 = vshrl.u32 %v1276, 5
    %v1278 = vand.u32 %v1276, 31
    %v1279 = vsub.s32 32, %v1278
    %v1280 = vshrl.u32 683565275, %v1279
    %v1281 = vshll.u32 683565275, %v1278
    %v1282 = vshrl.u32 2475754826, %v1279
    %v1283 = vor.u32 %v1281, %v1282
    %v1284 = vshll.u32 2475754826, %v1278
    %v1285 = vshrl.u32 2131351028, %v1279
    %v1286 = vor.u32 %v1284, %v1285
    %v1287 = vshll.u32 2131351028, %v1278
    %v1288 = vshrl.u32 2102212464, %v1279
    %v1289 = vor.u32 %v1287, %v1288
    %v1290 = vshll.u32 2102212464, %v1278
    %v1291 = vshrl.u32 920167782, %v1279
    %v1292 = vor.u32 %v1290, %v1291
    %v1293 = vshll.u32 920167782, %v1278
    %v1294 = vshrl.u32 1326507024, %v1279
    %v1295 = vor.u32 %v1293, %v1294
    %vm1296 = vcmp.lt.s32.totalorder %v1277, 1
    %vm1297 = vcmp.lt.s32.totalorder %v1277, 2
    %vm1298 = vcmp.lt.s32.totalorder %v1277, 3
    %vm1299 = vcmp.lt.s32.totalorder %v1277, 4
    %v1300 = vsel %vm1296, %v1280, %v1283
    %v1301 = vsel %vm1299, %v1289, 2102212464
    %v1302 = vsel %vm1298, %v1286, %v1301
    %v1303 = vsel %vm1297, %v1300, %v1302
    %v1304 = vsel %vm1296, %v1283, %v1286
    %v1305 = vsel %vm1299, %v1292, 920167782
    %v1306 = vsel %vm1298, %v1289, %v1305
    %v1307 = vsel %vm1297, %v1304, %v1306
    %v1308 = vsel %vm1296, %v1286, %v1289
    %v1309 = vsel %vm1299, %v1295, 1326507024
    %v1310 = vsel %vm1298, %v1292, %v1309
    %v1311 = vsel %vm1297, %v1308, %v1310
    %v1312 = vshll.u32 %v1272, 8
    %v1313 = vmul.u32.u64.compose %v1312, %v1311
    %v1314 = vextract.low.u32 %v1313
    %v1315 = vextract.high.u32 %v1313
    %v1316 = vmul.u32.u64.compose %v1312, %v1307
    %v1317 = vextract.low.u32 %v1316
    %v1318 = vextract.high.u32 %v1316
    %v1319 = vmul.u32 %v1312, %v1303
    %v1320 = vadd.s32 %v1315, %v1317
    %vm1321 = vc.u32 %v1315, %v1317
    %v1322 = vadd.s32 %v1318, 1
    %v1323 = vsel %vm1321, %v1322, %v1318
    %v1324 = vadd.s32 %v1319, %v1323
    %v1325 = vadd.s32 %v1324, 536870912
    %v1326 = vshrl.u32 %v1325, 30
    %v1327 = vshll.u32 %v1326, 30
    %v1328 = vsub.s32 %v1324, %v1327
    %vm1329 = vcmp.lt.s32.totalorder %v1328, 0
    %v1330 = vsub.s32 0, %v1328
    %v1331 = vsel %vm1329, %v1330, %v1328
    %v1332 = vclz %v1331
    %v1333 = vsub.s32 %v1332, 2
    %vm1334 = vcmp.gt.s32.totalorder 0, %v1333
    %v1335 = vsel %vm1334, 0, %v1333
    %v1336 = vsub.s32 32, %v1335
    %v1337 = vshll.u32 %v1328, %v1335
    %v1338 = vshrl.u32 %v1320, %v1336
    %v1339 = vor.u32 %v1337, %v1338
    %v1340 = vsub.s32 4294967266, %v1335
    %v1341 = vadd.s32 %v1340, 127
    %v1342 = vshll.u32 %v1341, 23
    %v1343 = vor.u32 4788187, %v1342
    %v1344 = vand.u32 2147483647, %v1343
    %v1346 = vcvt.s32.f32 %v1339
    %v1347 = vmul.f32 %v1346, %v1344
    %v1348 = vxor.u32 %v1347, 2147483648
    %v1349 = vsel %vm1266, %v1348, %v1347
    %v1350 = vsub.s32 4, %v1326
    %v1351 = vsel %vm1266, %v1350, %v1326
    %v1352 = vsel %vm1265, %v1155, %v1349
    %v1353 = vsel %vm1265, 0, %v1351
    %v1354 = vcosq.f32.pop %v1352
    %v1355 = vsinq.f32.pop %v1352
    %vm1356 = vweird.f32 %v1155
    %v1357 = vadd.s32 %v1353, 3
    %v1358 = vand.u32 %v1357, 3
    %vm1359 = vcmp.lt.s32.totalorder %v1358, 2
    %vm1360 = vcmp.eq.s32.totalorder %v1358, 0
    %v1361 = vxor.u32 %v1355, 2147483648
    %v1362 = vsel %vm1360, %v1354, %v1361
    %vm1363 = vcmp.eq.s32.totalorder %v1358, 2
    %v1364 = vxor.u32 %v1354, 2147483648
    %v1365 = vsel %vm1363, %v1364, %v1355
    %v1366 = vsel %vm1359, %v1362, %v1365
    %v1367 = vsel %vm1356, nan, %v1366
    %v1368 = vand.u32 2147483647, %v1156
    %vm1369 = vcmp.le.f32.partialorder %v1368, 0.7853982
    %vm1370 = vcmp.lt.s32.totalorder %v1156, 0
    %v1371 = vand.u32 %v1156, 2139095040
    %v1372 = vshrl.u32 %v1371, 23
    %v1373 = vsub.s32 %v1372, 127
    %v1374 = vand.u32 2147483647, %v1156
    %v1375 = vand.u32 %v1374, 8388607
    %v1376 = vor.u32 %v1375, 8388608
    %v1377 = vsub.s32 0, %v1376
    %v1378 = vadd.s32 %v1373, 1
    %vm1379 = vcmp.gt.s32.totalorder %v1378, 0
    %v1380 = vsel %vm1379, %v1378, 0
    %v1381 = vshrl.u32 %v1380, 5
    %v1382 = vand.u32 %v1380, 31
    %v1383 = vsub.s32 32, %v1382
    %v1384 = vshrl.u32 683565275, %v1383
    %v1385 = vshll.u32 683565275, %v1382
    %v1386 = vshrl.u32 2475754826, %v1383
    %v1387 = vor.u32 %v1385, %v1386
    %v1388 = vshll.u32 2475754826, %v1382
    %v1389 = vshrl.u32 2131351028, %v1383
    %v1390 = vor.u32 %v1388, %v1389
    %v1391 = vshll.u32 2131351028, %v1382
    %v1392 = vshrl.u32 2102212464, %v1383
    %v1393 = vor.u32 %v1391, %v1392
    %v1394 = vshll.u32 2102212464, %v1382
    %v1395 = vshrl.u32 920167782, %v1383
    %v1396 = vor.u32 %v1394, %v1395
    %v1397 = vshll.u32 920167782, %v1382
    %v1398 = vshrl.u32 1326507024, %v1383
    %v1399 = vor.u32 %v1397, %v1398
    %vm1400 = vcmp.lt.s32.totalorder %v1381, 1
    %vm1401 = vcmp.lt.s32.totalorder %v1381, 2
    %vm1402 = vcmp.lt.s32.totalorder %v1381, 3
    %vm1403 = vcmp.lt.s32.totalorder %v1381, 4
    %v1404 = vsel %vm1400, %v1384, %v1387
    %v1405 = vsel %vm1403, %v1393, 2102212464
    %v1406 = vsel %vm1402, %v1390, %v1405
    %v1407 = vsel %vm1401, %v1404, %v1406
    %v1408 = vsel %vm1400, %v1387, %v1390
    %v1409 = vsel %vm1403, %v1396, 920167782
    %v1410 = vsel %vm1402, %v1393, %v1409
    %v1411 = vsel %vm1401, %v1408, %v1410
    %v1412 = vsel %vm1400, %v1390, %v1393
    %v1413 = vsel %vm1403, %v1399, 1326507024
    %v1414 = vsel %vm1402, %v1396, %v1413
    %v1415 = vsel %vm1401, %v1412, %v1414
    %v1416 = vshll.u32 %v1376, 8
    %v1417 = vmul.u32.u64.compose %v1416, %v1415
    %v1418 = vextract.low.u32 %v1417
    %v1419 = vextract.high.u32 %v1417
    %v1420 = vmul.u32.u64.compose %v1416, %v1411
    %v1421 = vextract.low.u32 %v1420
    %v1422 = vextract.high.u32 %v1420
    %v1423 = vmul.u32 %v1416, %v1407
    %v1424 = vadd.s32 %v1419, %v1421
    %vm1425 = vc.u32 %v1419, %v1421
    %v1426 = vadd.s32 %v1422, 1
    %v1427 = vsel %vm1425, %v1426, %v1422
    %v1428 = vadd.s32 %v1423, %v1427
    %v1429 = vadd.s32 %v1428, 536870912
    %v1430 = vshrl.u32 %v1429, 30
    %v1431 = vshll.u32 %v1430, 30
    %v1432 = vsub.s32 %v1428, %v1431
    %vm1433 = vcmp.lt.s32.totalorder %v1432, 0
    %v1434 = vsub.s32 0, %v1432
    %v1435 = vsel %vm1433, %v1434, %v1432
    %v1436 = vclz %v1435
    %v1437 = vsub.s32 %v1436, 2
    %vm1438 = vcmp.gt.s32.totalorder 0, %v1437
    %v1439 = vsel %vm1438, 0, %v1437
    %v1440 = vsub.s32 32, %v1439
    %v1441 = vshll.u32 %v1432, %v1439
    %v1442 = vshrl.u32 %v1424, %v1440
    %v1443 = vor.u32 %v1441, %v1442
    %v1444 = vsub.s32 4294967266, %v1439
    %v1445 = vadd.s32 %v1444, 127
    %v1446 = vshll.u32 %v1445, 23
    %v1447 = vor.u32 4788187, %v1446
    %v1448 = vand.u32 2147483647, %v1447
    %v1450 = vcvt.s32.f32 %v1443
    %v1451 = vmul.f32 %v1450, %v1448
    %v1452 = vxor.u32 %v1451, 2147483648
    %v1453 = vsel %vm1370, %v1452, %v1451
    %v1454 = vsub.s32 4, %v1430
    %v1455 = vsel %vm1370, %v1454, %v1430
    %v1456 = vsel %vm1369, %v1156, %v1453
    %v1457 = vsel %vm1369, 0, %v1455
    %v1458 = vcosq.f32.pop %v1456
    %v1459 = vsinq.f32.pop %v1456
    %vm1460 = vweird.f32 %v1156
    %v1461 = vadd.s32 %v1457, 3
    %v1462 = vand.u32 %v1461, 3
    %vm1463 = vcmp.lt.s32.totalorder %v1462, 2
    %vm1464 = vcmp.eq.s32.totalorder %v1462, 0
    %v1465 = vxor.u32 %v1459, 2147483648
    %v1466 = vsel %vm1464, %v1458, %v1465
    %vm1467 = vcmp.eq.s32.totalorder %v1462, 2
    %v1468 = vxor.u32 %v1458, 2147483648
    %v1469 = vsel %vm1467, %v1468, %v1459
    %v1470 = vsel %vm1463, %v1466, %v1469
    %v1471 = vsel %vm1460, nan, %v1470
    %v1472 = vand.u32 2147483647, %v1157
    %vm1473 = vcmp.le.f32.partialorder %v1472, 0.7853982
    %vm1474 = vcmp.lt.s32.totalorder %v1157, 0
    %v1475 = vand.u32 %v1157, 2139095040
    %v1476 = vshrl.u32 %v1475, 23
    %v1477 = vsub.s32 %v1476, 127
    %v1478 = vand.u32 2147483647, %v1157
    %v1479 = vand.u32 %v1478, 8388607
    %v1480 = vor.u32 %v1479, 8388608
    %v1481 = vsub.s32 0, %v1480
    %v1482 = vadd.s32 %v1477, 1
    %vm1483 = vcmp.gt.s32.totalorder %v1482, 0
    %v1484 = vsel %vm1483, %v1482, 0
    %v1485 = vshrl.u32 %v1484, 5
    %v1486 = vand.u32 %v1484, 31
    %v1487 = vsub.s32 32, %v1486
    %v1488 = vshrl.u32 683565275, %v1487
    %v1489 = vshll.u32 683565275, %v1486
    %v1490 = vshrl.u32 2475754826, %v1487
    %v1491 = vor.u32 %v1489, %v1490
    %v1492 = vshll.u32 2475754826, %v1486
    %v1493 = vshrl.u32 2131351028, %v1487
    %v1494 = vor.u32 %v1492, %v1493
    %v1495 = vshll.u32 2131351028, %v1486
    %v1496 = vshrl.u32 2102212464, %v1487
    %v1497 = vor.u32 %v1495, %v1496
    %v1498 = vshll.u32 2102212464, %v1486
    %v1499 = vshrl.u32 920167782, %v1487
    %v1500 = vor.u32 %v1498, %v1499
    %v1501 = vshll.u32 920167782, %v1486
    %v1502 = vshrl.u32 1326507024, %v1487
    %v1503 = vor.u32 %v1501, %v1502
    %vm1504 = vcmp.lt.s32.totalorder %v1485, 1
    %vm1505 = vcmp.lt.s32.totalorder %v1485, 2
    %vm1506 = vcmp.lt.s32.totalorder %v1485, 3
    %vm1507 = vcmp.lt.s32.totalorder %v1485, 4
    %v1508 = vsel %vm1504, %v1488, %v1491
    %v1509 = vsel %vm1507, %v1497, 2102212464
    %v1510 = vsel %vm1506, %v1494, %v1509
    %v1511 = vsel %vm1505, %v1508, %v1510
    %v1512 = vsel %vm1504, %v1491, %v1494
    %v1513 = vsel %vm1507, %v1500, 920167782
    %v1514 = vsel %vm1506, %v1497, %v1513
    %v1515 = vsel %vm1505, %v1512, %v1514
    %v1516 = vsel %vm1504, %v1494, %v1497
    %v1517 = vsel %vm1507, %v1503, 1326507024
    %v1518 = vsel %vm1506, %v1500, %v1517
    %v1519 = vsel %vm1505, %v1516, %v1518
    %v1520 = vshll.u32 %v1480, 8
    %v1521 = vmul.u32.u64.compose %v1520, %v1519
    %v1522 = vextract.low.u32 %v1521
    %v1523 = vextract.high.u32 %v1521
    %v1524 = vmul.u32.u64.compose %v1520, %v1515
    %v1525 = vextract.low.u32 %v1524
    %v1526 = vextract.high.u32 %v1524
    %v1527 = vmul.u32 %v1520, %v1511
    %v1528 = vadd.s32 %v1523, %v1525
    %vm1529 = vc.u32 %v1523, %v1525
    %v1530 = vadd.s32 %v1526, 1
    %v1531 = vsel %vm1529, %v1530, %v1526
    %v1532 = vadd.s32 %v1527, %v1531
    %v1533 = vadd.s32 %v1532, 536870912
    %v1534 = vshrl.u32 %v1533, 30
    %v1535 = vshll.u32 %v1534, 30
    %v1536 = vsub.s32 %v1532, %v1535
    %vm1537 = vcmp.lt.s32.totalorder %v1536, 0
    %v1538 = vsub.s32 0, %v1536
    %v1539 = vsel %vm1537, %v1538, %v1536
    %v1540 = vclz %v1539
    %v1541 = vsub.s32 %v1540, 2
    %vm1542 = vcmp.gt.s32.totalorder 0, %v1541
    %v1543 = vsel %vm1542, 0, %v1541
    %v1544 = vsub.s32 32, %v1543
    %v1545 = vshll.u32 %v1536, %v1543
    %v1546 = vshrl.u32 %v1528, %v1544
    %v1547 = vor.u32 %v1545, %v1546
    %v1548 = vsub.s32 4294967266, %v1543
    %v1549 = vadd.s32 %v1548, 127
    %v1550 = vshll.u32 %v1549, 23
    %v1551 = vor.u32 4788187, %v1550
    %v1552 = vand.u32 2147483647, %v1551
    %v1554 = vcvt.s32.f32 %v1547
    %v1555 = vmul.f32 %v1554, %v1552
    %v1556 = vxor.u32 %v1555, 2147483648
    %v1557 = vsel %vm1474, %v1556, %v1555
    %v1558 = vsub.s32 4, %v1534
    %v1559 = vsel %vm1474, %v1558, %v1534
    %v1560 = vsel %vm1473, %v1157, %v1557
    %v1561 = vsel %vm1473, 0, %v1559
    %v1562 = vcosq.f32.pop %v1560
    %v1563 = vsinq.f32.pop %v1560
    %vm1564 = vweird.f32 %v1157
    %v1565 = vadd.s32 %v1561, 3
    %v1566 = vand.u32 %v1565, 3
    %vm1567 = vcmp.lt.s32.totalorder %v1566, 2
    %vm1568 = vcmp.eq.s32.totalorder %v1566, 0
    %v1569 = vxor.u32 %v1563, 2147483648
    %v1570 = vsel %vm1568, %v1562, %v1569
    %vm1571 = vcmp.eq.s32.totalorder %v1566, 2
    %v1572 = vxor.u32 %v1562, 2147483648
    %v1573 = vsel %vm1571, %v1572, %v1563
    %v1574 = vsel %vm1567, %v1570, %v1573
    %v1575 = vsel %vm1564, nan, %v1574
    %v1576 = vand.u32 2147483647, %v1158
    %vm1577 = vcmp.le.f32.partialorder %v1576, 0.7853982
    %vm1578 = vcmp.lt.s32.totalorder %v1158, 0
    %v1579 = vand.u32 %v1158, 2139095040
    %v1580 = vshrl.u32 %v1579, 23
    %v1581 = vsub.s32 %v1580, 127
    %v1582 = vand.u32 2147483647, %v1158
    %v1583 = vand.u32 %v1582, 8388607
    %v1584 = vor.u32 %v1583, 8388608
    %v1585 = vsub.s32 0, %v1584
    %v1586 = vadd.s32 %v1581, 1
    %vm1587 = vcmp.gt.s32.totalorder %v1586, 0
    %v1588 = vsel %vm1587, %v1586, 0
    %v1589 = vshrl.u32 %v1588, 5
    %v1590 = vand.u32 %v1588, 31
    %v1591 = vsub.s32 32, %v1590
    %v1592 = vshrl.u32 683565275, %v1591
    %v1593 = vshll.u32 683565275, %v1590
    %v1594 = vshrl.u32 2475754826, %v1591
    %v1595 = vor.u32 %v1593, %v1594
    %v1596 = vshll.u32 2475754826, %v1590
    %v1597 = vshrl.u32 2131351028, %v1591
    %v1598 = vor.u32 %v1596, %v1597
    %v1599 = vshll.u32 2131351028, %v1590
    %v1600 = vshrl.u32 2102212464, %v1591
    %v1601 = vor.u32 %v1599, %v1600
    %v1602 = vshll.u32 2102212464, %v1590
    %v1603 = vshrl.u32 920167782, %v1591
    %v1604 = vor.u32 %v1602, %v1603
    %v1605 = vshll.u32 920167782, %v1590
    %v1606 = vshrl.u32 1326507024, %v1591
    %v1607 = vor.u32 %v1605, %v1606
    %vm1608 = vcmp.lt.s32.totalorder %v1589, 1
    %vm1609 = vcmp.lt.s32.totalorder %v1589, 2
    %vm1610 = vcmp.lt.s32.totalorder %v1589, 3
    %vm1611 = vcmp.lt.s32.totalorder %v1589, 4
    %v1612 = vsel %vm1608, %v1592, %v1595
    %v1613 = vsel %vm1611, %v1601, 2102212464
    %v1614 = vsel %vm1610, %v1598, %v1613
    %v1615 = vsel %vm1609, %v1612, %v1614
    %v1616 = vsel %vm1608, %v1595, %v1598
    %v1617 = vsel %vm1611, %v1604, 920167782
    %v1618 = vsel %vm1610, %v1601, %v1617
    %v1619 = vsel %vm1609, %v1616, %v1618
    %v1620 = vsel %vm1608, %v1598, %v1601
    %v1621 = vsel %vm1611, %v1607, 1326507024
    %v1622 = vsel %vm1610, %v1604, %v1621
    %v1623 = vsel %vm1609, %v1620, %v1622
    %v1624 = vshll.u32 %v1584, 8
    %v1625 = vmul.u32.u64.compose %v1624, %v1623
    %v1626 = vextract.low.u32 %v1625
    %v1627 = vextract.high.u32 %v1625
    %v1628 = vmul.u32.u64.compose %v1624, %v1619
    %v1629 = vextract.low.u32 %v1628
    %v1630 = vextract.high.u32 %v1628
    %v1631 = vmul.u32 %v1624, %v1615
    %v1632 = vadd.s32 %v1627, %v1629
    %vm1633 = vc.u32 %v1627, %v1629
    %v1634 = vadd.s32 %v1630, 1
    %v1635 = vsel %vm1633, %v1634, %v1630
    %v1636 = vadd.s32 %v1631, %v1635
    %v1637 = vadd.s32 %v1636, 536870912
    %v1638 = vshrl.u32 %v1637, 30
    %v1639 = vshll.u32 %v1638, 30
    %v1640 = vsub.s32 %v1636, %v1639
    %vm1641 = vcmp.lt.s32.totalorder %v1640, 0
    %v1642 = vsub.s32 0, %v1640
    %v1643 = vsel %vm1641, %v1642, %v1640
    %v1644 = vclz %v1643
    %v1645 = vsub.s32 %v1644, 2
    %vm1646 = vcmp.gt.s32.totalorder 0, %v1645
    %v1647 = vsel %vm1646, 0, %v1645
    %v1648 = vsub.s32 32, %v1647
    %v1649 = vshll.u32 %v1640, %v1647
    %v1650 = vshrl.u32 %v1632, %v1648
    %v1651 = vor.u32 %v1649, %v1650
    %v1652 = vsub.s32 4294967266, %v1647
    %v1653 = vadd.s32 %v1652, 127
    %v1654 = vshll.u32 %v1653, 23
    %v1655 = vor.u32 4788187, %v1654
    %v1656 = vand.u32 2147483647, %v1655
    %v1658 = vcvt.s32.f32 %v1651
    %v1659 = vmul.f32 %v1658, %v1656
    %v1660 = vxor.u32 %v1659, 2147483648
    %v1661 = vsel %vm1578, %v1660, %v1659
    %v1662 = vsub.s32 4, %v1638
    %v1663 = vsel %vm1578, %v1662, %v1638
    %v1664 = vsel %vm1577, %v1158, %v1661
    %v1665 = vsel %vm1577, 0, %v1663
    %v1666 = vcosq.f32.pop %v1664
    %v1667 = vsinq.f32.pop %v1664
    %vm1668 = vweird.f32 %v1158
    %v1669 = vadd.s32 %v1665, 3
    %v1670 = vand.u32 %v1669, 3
    %vm1671 = vcmp.lt.s32.totalorder %v1670, 2
    %vm1672 = vcmp.eq.s32.totalorder %v1670, 0
    %v1673 = vxor.u32 %v1667, 2147483648
    %v1674 = vsel %vm1672, %v1666, %v1673
    %vm1675 = vcmp.eq.s32.totalorder %v1670, 2
    %v1676 = vxor.u32 %v1666, 2147483648
    %v1677 = vsel %vm1675, %v1676, %v1667
    %v1678 = vsel %vm1671, %v1674, %v1677
    %v1679 = vsel %vm1668, nan, %v1678
    %v1680 = vand.u32 2147483647, %v1159
    %vm1681 = vcmp.le.f32.partialorder %v1680, 0.7853982
    %vm1682 = vcmp.lt.s32.totalorder %v1159, 0
    %v1683 = vand.u32 %v1159, 2139095040
    %v1684 = vshrl.u32 %v1683, 23
    %v1685 = vsub.s32 %v1684, 127
    %v1686 = vand.u32 2147483647, %v1159
    %v1687 = vand.u32 %v1686, 8388607
    %v1688 = vor.u32 %v1687, 8388608
    %v1689 = vsub.s32 0, %v1688
    %v1690 = vadd.s32 %v1685, 1
    %vm1691 = vcmp.gt.s32.totalorder %v1690, 0
    %v1692 = vsel %vm1691, %v1690, 0
    %v1693 = vshrl.u32 %v1692, 5
    %v1694 = vand.u32 %v1692, 31
    %v1695 = vsub.s32 32, %v1694
    %v1696 = vshrl.u32 683565275, %v1695
    %v1697 = vshll.u32 683565275, %v1694
    %v1698 = vshrl.u32 2475754826, %v1695
    %v1699 = vor.u32 %v1697, %v1698
    %v1700 = vshll.u32 2475754826, %v1694
    %v1701 = vshrl.u32 2131351028, %v1695
    %v1702 = vor.u32 %v1700, %v1701
    %v1703 = vshll.u32 2131351028, %v1694
    %v1704 = vshrl.u32 2102212464, %v1695
    %v1705 = vor.u32 %v1703, %v1704
    %v1706 = vshll.u32 2102212464, %v1694
    %v1707 = vshrl.u32 920167782, %v1695
    %v1708 = vor.u32 %v1706, %v1707
    %v1709 = vshll.u32 920167782, %v1694
    %v1710 = vshrl.u32 1326507024, %v1695
    %v1711 = vor.u32 %v1709, %v1710
    %vm1712 = vcmp.lt.s32.totalorder %v1693, 1
    %vm1713 = vcmp.lt.s32.totalorder %v1693, 2
    %vm1714 = vcmp.lt.s32.totalorder %v1693, 3
    %vm1715 = vcmp.lt.s32.totalorder %v1693, 4
    %v1716 = vsel %vm1712, %v1696, %v1699
    %v1717 = vsel %vm1715, %v1705, 2102212464
    %v1718 = vsel %vm1714, %v1702, %v1717
    %v1719 = vsel %vm1713, %v1716, %v1718
    %v1720 = vsel %vm1712, %v1699, %v1702
    %v1721 = vsel %vm1715, %v1708, 920167782
    %v1722 = vsel %vm1714, %v1705, %v1721
    %v1723 = vsel %vm1713, %v1720, %v1722
    %v1724 = vsel %vm1712, %v1702, %v1705
    %v1725 = vsel %vm1715, %v1711, 1326507024
    %v1726 = vsel %vm1714, %v1708, %v1725
    %v1727 = vsel %vm1713, %v1724, %v1726
    %v1728 = vshll.u32 %v1688, 8
    %v1729 = vmul.u32.u64.compose %v1728, %v1727
    %v1730 = vextract.low.u32 %v1729
    %v1731 = vextract.high.u32 %v1729
    %v1732 = vmul.u32.u64.compose %v1728, %v1723
    %v1733 = vextract.low.u32 %v1732
    %v1734 = vextract.high.u32 %v1732
    %v1735 = vmul.u32 %v1728, %v1719
    %v1736 = vadd.s32 %v1731, %v1733
    %vm1737 = vc.u32 %v1731, %v1733
    %v1738 = vadd.s32 %v1734, 1
    %v1739 = vsel %vm1737, %v1738, %v1734
    %v1740 = vadd.s32 %v1735, %v1739
    %v1741 = vadd.s32 %v1740, 536870912
    %v1742 = vshrl.u32 %v1741, 30
    %v1743 = vshll.u32 %v1742, 30
    %v1744 = vsub.s32 %v1740, %v1743
    %vm1745 = vcmp.lt.s32.totalorder %v1744, 0
    %v1746 = vsub.s32 0, %v1744
    %v1747 = vsel %vm1745, %v1746, %v1744
    %v1748 = vclz %v1747
    %v1749 = vsub.s32 %v1748, 2
    %vm1750 = vcmp.gt.s32.totalorder 0, %v1749
    %v1751 = vsel %vm1750, 0, %v1749
    %v1752 = vsub.s32 32, %v1751
    %v1753 = vshll.u32 %v1744, %v1751
    %v1754 = vshrl.u32 %v1736, %v1752
    %v1755 = vor.u32 %v1753, %v1754
    %v1756 = vsub.s32 4294967266, %v1751
    %v1757 = vadd.s32 %v1756, 127
    %v1758 = vshll.u32 %v1757, 23
    %v1759 = vor.u32 4788187, %v1758
    %v1760 = vand.u32 2147483647, %v1759
    %v1762 = vcvt.s32.f32 %v1755
    %v1763 = vmul.f32 %v1762, %v1760
    %v1764 = vxor.u32 %v1763, 2147483648
    %v1765 = vsel %vm1682, %v1764, %v1763
    %v1766 = vsub.s32 4, %v1742
    %v1767 = vsel %vm1682, %v1766, %v1742
    %v1768 = vsel %vm1681, %v1159, %v1765
    %v1769 = vsel %vm1681, 0, %v1767
    %v1770 = vcosq.f32.pop %v1768
    %v1771 = vsinq.f32.pop %v1768
    %vm1772 = vweird.f32 %v1159
    %v1773 = vadd.s32 %v1769, 3
    %v1774 = vand.u32 %v1773, 3
    %vm1775 = vcmp.lt.s32.totalorder %v1774, 2
    %vm1776 = vcmp.eq.s32.totalorder %v1774, 0
    %v1777 = vxor.u32 %v1771, 2147483648
    %v1778 = vsel %vm1776, %v1770, %v1777
    %vm1779 = vcmp.eq.s32.totalorder %v1774, 2
    %v1780 = vxor.u32 %v1770, 2147483648
    %v1781 = vsel %vm1779, %v1780, %v1771
    %v1782 = vsel %vm1775, %v1778, %v1781
    %v1783 = vsel %vm1772, nan, %v1782
    %1784 = vst [vmem:[#allocation8] sm:$0xff] %v1263
    %1785 = vst [vmem:[#allocation8 + $0x8] sm:$0xff] %v1367
    %vm1786 = vcmask 261120
    %1787 = vst.msk [vmem:[#allocation8 + $0x10] sm:$0xff] %vm1786, %v1471
    %1788 = vst [vmem:[#allocation8 + $0x18] sm:$0xff] %v1575
    %1789 = vst [vmem:[#allocation8 + $0x20] sm:$0xff] %v1679
    %1790 = vst.msk [vmem:[#allocation8 + $0x28] sm:$0xff] %vm1786, %v1783
    // Predicated region
    $region30: #{tpu_custom_call.1} parent=1 // pred_check
      _
    $region31: #{tpu_custom_call.1} parent=1 // pred_check_branch
      %1792 = sbr.rel (0) target = $region33
    $region32: #{tpu_custom_call.1} parent=1 // pred_region
      %s1794 = ssub.s32 768, 768
      %1795 = vsyncadd [#allocation4], %s1794
      %s1796 = sshll.u32 [#allocation8], 4
      %s1797 = int_to_ptr.vmem [resolvable:$true] %s1796
      %1802 = dma.vmem_to_hbm [thread:$0]  %s1797, 768, %s4, [#allocation4], 384, 384, 24
    $region33: #{tpu_custom_call.1} parent=1 // pred_fallthru
      _
    // Predicated region
    $region34: #{tpu_custom_call.1} parent=1 // pred_check
      _
    $region35: #{tpu_custom_call.1} parent=1 // pred_check_branch
      %1804 = sbr.rel (0) target = $region37
    $region36: #{tpu_custom_call.1} parent=1 // pred_region
      %1805 = dma.done [#allocation4], 768
    $region37: #{tpu_custom_call.1} parent=1 // pred_fallthru
      _
    %1806 = vsyncpa [#allocation3], 1
    %1807 = vsyncpa [#allocation6], 1
    %1808 = vsyncpa [#allocation4], 1

</llo_original>
